<compile_context>
chip_gen: v5e
topology: v5e:2x2
jax: 0.10.0
libtpu: 0.0.40
codegen_flags: <defaults>
</compile_context>

<pallas_src>
import functools

import numpy as np
import jax
import jax.numpy as jnp
from jax.experimental import pallas as pl
from jax.experimental.pallas import tpu as pltpu

_BN_EPS = 1e-5
_SQRT_HALF = 0.7071067811865476


# ----------------------------------------------------------------------------
# exact GELU (erf-based, like torch.nn.GELU()) built only from exp/abs/where so
# it lowers cleanly inside Mosaic.  Abramowitz & Stegun 7.1.26: |err| < 1.5e-7.
# ----------------------------------------------------------------------------
def _erf(x):
    p = 0.3275911
    a1, a2, a3, a4, a5 = (0.254829592, -0.284496736, 1.421413741,
                          -1.453152027, 1.061405429)
    z = jnp.abs(x)
    t = 1.0 / (1.0 + p * z)
    poly = ((((a5 * t + a4) * t + a3) * t + a2) * t + a1) * t
    y = 1.0 - poly * jnp.exp(-z * z)
    return jnp.where(x >= 0.0, y, -y)


def _gelu_exact(x):
    return 0.5 * x * (1.0 + _erf(x * _SQRT_HALF))


# ----------------------------------------------------------------------------
# Fused kernel: unfold + SegmentationBlock + LSTM + BN/residual + FCBlock
# ----------------------------------------------------------------------------
def _patch_rnn_kernel(x_ref, pe_ref, wseg_ref, bseg_ref, bn1s_ref, bn1t_ref,
                      wih_ref, whh_ref, bn2s_ref, bn2t_ref,
                      w1_ref, b1_ref, w2_ref, b2_ref,
                      out_ref, u_scr, rnn_scr):
    B, F = x_ref.shape
    K = whh_ref.shape[0]
    G = 4 * K
    L = F - K + 1

    # ---- unfold(-1, K, 1) straight into the lane-dense batch-first layout ----
    # u_scr[b, l*K + k] = x[b, l + k]   (exact, no matmul / no gather)
    x = x_ref[...]                                       # (B, F), one vreg
    for l in range(L):                                   # static window slices
        u_scr[:, l * K:(l + 1) * K] = x[:, l:l + K]
    u = u_scr[...] + pe_ref[...]                         # + learnable PE, (B, L*K)

    # ---- SegmentationBlock: Linear(K,K) per window as ONE block-diag matmul,
    #      GELU, folded BatchNorm1d(L) — all lane-dense ----
    s_flat = _gelu_exact(jnp.dot(u, wseg_ref[...],
                                 preferred_element_type=jnp.float32) + bseg_ref[...])
    s_flat = s_flat * bn1s_ref[...] + bn1t_ref[...]      # (B, L*K)

    # input half of the LSTM gates for every timestep at once (off the serial
    # path): (B, L*K) @ block-diag(w_ih^T) -> (B, L*4K)
    gx_all = jnp.dot(s_flat, wih_ref[...], preferred_element_type=jnp.float32)

    # ---- LSTM(K, K, bias=False), PyTorch gate order (i, f, g, o), unrolled ----
    whh_t = whh_ref[...]                                 # (K, 4K), loaded once
    whh_rows = [whh_t[k:k + 1, :] for k in range(K)]

    h = jnp.zeros((B, K), jnp.float32)
    c = jnp.zeros((B, K), jnp.float32)
    for t in range(L):                                   # fully unrolled serial chain
        gates = gx_all[:, t * G:(t + 1) * G]             # precomputed input part
        for k in range(K):                               # recurrent matvec on the VPU
            gates = gates + h[:, k:k + 1] * whh_rows[k]
        sig = jax.nn.sigmoid(gates)                      # i, f, o gates
        g_g = jnp.tanh(gates[:, 2 * K:3 * K])            # tanh only on the g gate
        c = sig[:, K:2 * K] * c + sig[:, 0:K] * g_g
        h = sig[:, 3 * K:4 * K] * jnp.tanh(c)
        rnn_scr[:, t * K:(t + 1) * K] = h                # batch-first flat layout

    # ---- BatchNorm1d(L) on LSTM output (folded) + residual, lane-dense ----
    out_enc = rnn_scr[...] * bn2s_ref[...] + bn2t_ref[...] + s_flat   # (B, L*K)

    # ---- FCBlock: Linear(L*K,512) + GELU [+ Dropout=identity] + Linear(512,out) ----
    h1 = _gelu_exact(jnp.dot(out_enc, w1_ref[...],
                             preferred_element_type=jnp.float32) + b1_ref[...])
    out_ref[...] = jnp.dot(h1, w2_ref[...],
                           preferred_element_type=jnp.float32) + b2_ref[...]


# ----------------------------------------------------------------------------
# Wrapper
# ----------------------------------------------------------------------------
@functools.partial(jax.jit, static_argnames=("kernel_size",))
def patch_rnn_forward(x, params, *, kernel_size):
    K = kernel_size
    B, F = x.shape
    L = F - K + 1
    N = L * K
    G = 4 * K
    x = x.astype(jnp.float32)
    out_features = params["w_fc2"].shape[0]

    def bn_fold(g, b, m, v):                             # fold running stats
        scale = g * jax.lax.rsqrt(v + _BN_EPS)
        return scale, b - m * scale

    s1, t1 = bn_fold(params["bn1_g"], params["bn1_b"], params["bn1_m"], params["bn1_v"])
    s2, t2 = bn_fold(params["bn2_g"], params["bn2_b"], params["bn2_m"], params["bn2_v"])

    # block-diagonal weights so every in-kernel matmul is lane-dense
    eye_l = jnp.eye(L, dtype=jnp.float32)
    wseg_bd = jnp.einsum("lm,kj->lkmj", eye_l, params["w_seg"].T).reshape(N, N)
    wih_bd = jnp.einsum("lm,kj->lkmj", eye_l, params["w_ih"].T).reshape(N, L * G)

    args = (
        x,                                               # (B, F)
        params["pe"].reshape(1, N),                      # PE in flat (l*K+k) layout
        wseg_bd,                                         # (N, N) block-diag seg weight
        jnp.tile(params["b_seg"], L).reshape(1, N),      # seg bias tiled per window
        jnp.repeat(s1, K).reshape(1, N),                 # per-lane BN1 scale/shift
        jnp.repeat(t1, K).reshape(1, N),
        wih_bd,                                          # (N, L*4K) block-diag w_ih^T
        params["w_hh"].T,                                # (K, 4K)
        jnp.repeat(s2, K).reshape(1, N),                 # per-lane BN2 scale/shift
        jnp.repeat(t2, K).reshape(1, N),
        params["w_fc1"].T,                               # (N, 512)
        params["b_fc1"].reshape(1, -1),
        params["w_fc2"].T,                               # (512, out)
        params["b_fc2"].reshape(1, -1),
    )
    vmem = pl.BlockSpec(memory_space=pltpu.MemorySpace.VMEM)
    # TODO(synk): if B grows beyond toy size, add grid=(B//TB,) with
    # dimension_semantics=("parallel",) so a second TensorCore takes half the batch.
    return pl.pallas_call(
        _patch_rnn_kernel,
        out_shape=jax.ShapeDtypeStruct((B, out_features), jnp.float32),
        in_specs=[vmem] * len(args),
        out_specs=vmem,
        scratch_shapes=[pltpu.VMEM((B, N), jnp.float32),   # unfolded windows (flat)
                        pltpu.VMEM((B, N), jnp.float32)],  # LSTM hidden states (flat)
    )(*args)


# ----------------------------------------------------------------------------
# Deterministic synthetic parameters (shapes from the module's __init__)
# ----------------------------------------------------------------------------
def init_params(key, in_features, out_features, kernel_size):
    K = kernel_size
    L = in_features - K + 1
    ks = jax.random.split(key, 17)
    n = lambda k, shape, s: s * jax.random.normal(k, shape, jnp.float32)
    u = lambda k, shape, lo, hi: jax.random.uniform(k, shape, jnp.float32, lo, hi)
    return {
        # SegmentationBlock: LearnablePositionalEncoding (modeled as (L,K) table)
        # + weight_norm(Linear(K,K)) + GELU + BatchNorm1d(L)
        "pe": n(ks[0], (L, K), 0.02),
        "w_seg": n(ks[1], (K, K), 0.4), "b_seg": n(ks[2], (K,), 0.1),
        "bn1_g": u(ks[3], (L,), 0.8, 1.2), "bn1_b": n(ks[4], (L,), 0.1),
        "bn1_m": n(ks[5], (L,), 0.1), "bn1_v": u(ks[6], (L,), 0.5, 1.5),
        # nn.LSTM(K, K, num_layers=1, bias=False), gate order (i, f, g, o)
        "w_ih": n(ks[7], (4 * K, K), 0.4), "w_hh": n(ks[8], (4 * K, K), 0.4),
        # post-RNN BatchNorm1d(L)
        "bn2_g": u(ks[9], (L,), 0.8, 1.2), "bn2_b": n(ks[10], (L,), 0.1),
        "bn2_m": n(ks[11], (L,), 0.1), "bn2_v": u(ks[12], (L,), 0.5, 1.5),
        # FCBlock: weight_norm(Linear(L*K,512)) + GELU + Dropout + weight_norm(Linear(512,out))
        "w_fc1": n(ks[13], (512, L * K), 0.1), "b_fc1": n(ks[14], (512,), 0.05),
        "w_fc2": n(ks[15], (out_features, 512), 0.1), "b_fc2": n(ks[16], (out_features,), 0.05),
    }


# ----------------------------------------------------------------------------
# Pure-JAX reference (mirrors the PyTorch eval-mode forward) for validation
# ----------------------------------------------------------------------------
def reference_forward(x, params, *, kernel_size):
    K = kernel_size
    B, F = x.shape
    L = F - K + 1
    hi = jax.lax.Precision.HIGHEST
    idx = jnp.arange(L)[:, None] + jnp.arange(K)[None, :]
    s = x[:, idx] + params["pe"][None, :, :]
    s = jnp.einsum("blk,jk->blj", s, params["w_seg"], precision=hi) + params["b_seg"]
    s = jax.nn.gelu(s, approximate=False)

    def bn(t, g, b, m, v):
        scale = g * jax.lax.rsqrt(v + _BN_EPS)
        return (t - m[None, :, None]) * scale[None, :, None] + b[None, :, None]

    s = bn(s, params["bn1_g"], params["bn1_b"], params["bn1_m"], params["bn1_v"])

    w_ih_t, w_hh_t = params["w_ih"].T, params["w_hh"].T

    def step(carry, x_t):
        h, c = carry
        gates = (jnp.dot(x_t, w_ih_t, precision=hi) + jnp.dot(h, w_hh_t, precision=hi))
        i = jax.nn.sigmoid(gates[:, :K])
        f = jax.nn.sigmoid(gates[:, K:2 * K])
        g = jnp.tanh(gates[:, 2 * K:3 * K])
        o = jax.nn.sigmoid(gates[:, 3 * K:])
        c = f * c + i * g
        h = o * jnp.tanh(c)
        return (h, c), h

    z = jnp.zeros((B, K), jnp.float32)
    _, hs = jax.lax.scan(step, (z, z), jnp.transpose(s, (1, 0, 2)))
    rnn = jnp.transpose(hs, (1, 0, 2))
    out = bn(rnn, params["bn2_g"], params["bn2_b"], params["bn2_m"], params["bn2_v"]) + s
    flat = out.reshape(B, L * K)
    h1 = jax.nn.gelu(jnp.dot(flat, params["w_fc1"].T, precision=hi) + params["b_fc1"],
                     approximate=False)
    return jnp.dot(h1, params["w_fc2"].T, precision=hi) + params["b_fc2"]


if __name__ == "__main__":
    B, in_features, out_features, K = 4, 16, 8, 4

    key = jax.random.PRNGKey(0)
    kx, kp = jax.random.split(key)
    x = jax.random.normal(kx, (B, in_features), jnp.float32)
    params = init_params(kp, in_features, out_features, K)

    y = patch_rnn_forward(x, params, kernel_size=K)
    y = jax.block_until_ready(y)

    y_ref = reference_forward(x, params, kernel_size=K)
    assert y.shape == (B, out_features)
    err = float(jnp.max(jnp.abs(y - y_ref)))
    if not np.isfinite(err) or err > 5e-3:
        raise AssertionError(f"Pallas output mismatch vs reference, max abs err = {err}")
    print("KERNEL_OK")
</pallas_src>

<mosaic_0001>
module attributes {stable_mosaic.version = 11 : i64} {
  func.func @_patch_rnn_kernel(%arg0: memref<4x16xf32, #tpu.memory_space<vmem>>, %arg1: memref<1x52xf32, #tpu.memory_space<vmem>>, %arg2: memref<52x52xf32, #tpu.memory_space<vmem>>, %arg3: memref<1x52xf32, #tpu.memory_space<vmem>>, %arg4: memref<1x52xf32, #tpu.memory_space<vmem>>, %arg5: memref<1x52xf32, #tpu.memory_space<vmem>>, %arg6: memref<52x208xf32, #tpu.memory_space<vmem>>, %arg7: memref<4x16xf32, #tpu.memory_space<vmem>>, %arg8: memref<1x52xf32, #tpu.memory_space<vmem>>, %arg9: memref<1x52xf32, #tpu.memory_space<vmem>>, %arg10: memref<52x512xf32, #tpu.memory_space<vmem>>, %arg11: memref<1x512xf32, #tpu.memory_space<vmem>>, %arg12: memref<512x8xf32, #tpu.memory_space<vmem>>, %arg13: memref<1x8xf32, #tpu.memory_space<vmem>>, %arg14: memref<4x8xf32, #tpu.memory_space<vmem>>, %arg15: memref<4x52xf32, #tpu.memory_space<vmem>>, %arg16: memref<4x52xf32, #tpu.memory_space<vmem>>) attributes {dimension_semantics = [], scalar_prefetch = 0 : i64, scratch_operands = 2 : i64, tpu.core_type = #tpu.core_type<tc>} {
    %c0 = arith.constant 0 : index
    %c0_0 = arith.constant 0 : index
    %0 = vector.load %arg0[%c0, %c0_0] : memref<4x16xf32, #tpu.memory_space<vmem>>, vector<4x16xf32>
    %1 = vector.extract_strided_slice %0 {offsets = [0, 0], sizes = [4, 4], strides = [1, 1]} : vector<4x16xf32> to vector<4x4xf32>
    %c0_1 = arith.constant 0 : index
    %c0_2 = arith.constant 0 : index
    %2 = vector.load %arg15[%c0_1, %c0_2] : memref<4x52xf32, #tpu.memory_space<vmem>>, vector<4x4xf32>
    tpu.vector_store %arg15[%c0_1, %c0_2], %1 {strides = array<i32>} : memref<4x52xf32, #tpu.memory_space<vmem>>, vector<4x4xf32>,
    %3 = vector.extract_strided_slice %0 {offsets = [0, 1], sizes = [4, 4], strides = [1, 1]} : vector<4x16xf32> to vector<4x4xf32>
    %c0_3 = arith.constant 0 : index
    %c4 = arith.constant 4 : index
    %4 = vector.load %arg15[%c0_3, %c4] : memref<4x52xf32, #tpu.memory_space<vmem>>, vector<4x4xf32>
    tpu.vector_store %arg15[%c0_3, %c4], %3 {strides = array<i32>} : memref<4x52xf32, #tpu.memory_space<vmem>>, vector<4x4xf32>,
    %5 = vector.extract_strided_slice %0 {offsets = [0, 2], sizes = [4, 4], strides = [1, 1]} : vector<4x16xf32> to vector<4x4xf32>
    %c0_4 = arith.constant 0 : index
    %c8 = arith.constant 8 : index
    %6 = vector.load %arg15[%c0_4, %c8] : memref<4x52xf32, #tpu.memory_space<vmem>>, vector<4x4xf32>
    tpu.vector_store %arg15[%c0_4, %c8], %5 {strides = array<i32>} : memref<4x52xf32, #tpu.memory_space<vmem>>, vector<4x4xf32>,
    %7 = vector.extract_strided_slice %0 {offsets = [0, 3], sizes = [4, 4], strides = [1, 1]} : vector<4x16xf32> to vector<4x4xf32>
    %c0_5 = arith.constant 0 : index
    %c12 = arith.constant 12 : index
    %8 = vector.load %arg15[%c0_5, %c12] : memref<4x52xf32, #tpu.memory_space<vmem>>, vector<4x4xf32>
    tpu.vector_store %arg15[%c0_5, %c12], %7 {strides = array<i32>} : memref<4x52xf32, #tpu.memory_space<vmem>>, vector<4x4xf32>,
    %9 = vector.extract_strided_slice %0 {offsets = [0, 4], sizes = [4, 4], strides = [1, 1]} : vector<4x16xf32> to vector<4x4xf32>
    %c0_6 = arith.constant 0 : index
    %c16 = arith.constant 16 : index
    %10 = vector.load %arg15[%c0_6, %c16] : memref<4x52xf32, #tpu.memory_space<vmem>>, vector<4x4xf32>
    tpu.vector_store %arg15[%c0_6, %c16], %9 {strides = array<i32>} : memref<4x52xf32, #tpu.memory_space<vmem>>, vector<4x4xf32>,
    %11 = vector.extract_strided_slice %0 {offsets = [0, 5], sizes = [4, 4], strides = [1, 1]} : vector<4x16xf32> to vector<4x4xf32>
    %c0_7 = arith.constant 0 : index
    %c20 = arith.constant 20 : index
    %12 = vector.load %arg15[%c0_7, %c20] : memref<4x52xf32, #tpu.memory_space<vmem>>, vector<4x4xf32>
    tpu.vector_store %arg15[%c0_7, %c20], %11 {strides = array<i32>} : memref<4x52xf32, #tpu.memory_space<vmem>>, vector<4x4xf32>,
    %13 = vector.extract_strided_slice %0 {offsets = [0, 6], sizes = [4, 4], strides = [1, 1]} : vector<4x16xf32> to vector<4x4xf32>
    %c0_8 = arith.constant 0 : index
    %c24 = arith.constant 24 : index
    %14 = vector.load %arg15[%c0_8, %c24] : memref<4x52xf32, #tpu.memory_space<vmem>>, vector<4x4xf32>
    tpu.vector_store %arg15[%c0_8, %c24], %13 {strides = array<i32>} : memref<4x52xf32, #tpu.memory_space<vmem>>, vector<4x4xf32>,
    %15 = vector.extract_strided_slice %0 {offsets = [0, 7], sizes = [4, 4], strides = [1, 1]} : vector<4x16xf32> to vector<4x4xf32>
    %c0_9 = arith.constant 0 : index
    %c28 = arith.constant 28 : index
    %16 = vector.load %arg15[%c0_9, %c28] : memref<4x52xf32, #tpu.memory_space<vmem>>, vector<4x4xf32>
    tpu.vector_store %arg15[%c0_9, %c28], %15 {strides = array<i32>} : memref<4x52xf32, #tpu.memory_space<vmem>>, vector<4x4xf32>,
    %17 = vector.extract_strided_slice %0 {offsets = [0, 8], sizes = [4, 4], strides = [1, 1]} : vector<4x16xf32> to vector<4x4xf32>
    %c0_10 = arith.constant 0 : index
    %c32 = arith.constant 32 : index
    %18 = vector.load %arg15[%c0_10, %c32] : memref<4x52xf32, #tpu.memory_space<vmem>>, vector<4x4xf32>
    tpu.vector_store %arg15[%c0_10, %c32], %17 {strides = array<i32>} : memref<4x52xf32, #tpu.memory_space<vmem>>, vector<4x4xf32>,
    %19 = vector.extract_strided_slice %0 {offsets = [0, 9], sizes = [4, 4], strides = [1, 1]} : vector<4x16xf32> to vector<4x4xf32>
    %c0_11 = arith.constant 0 : index
    %c36 = arith.constant 36 : index
    %20 = vector.load %arg15[%c0_11, %c36] : memref<4x52xf32, #tpu.memory_space<vmem>>, vector<4x4xf32>
    tpu.vector_store %arg15[%c0_11, %c36], %19 {strides = array<i32>} : memref<4x52xf32, #tpu.memory_space<vmem>>, vector<4x4xf32>,
    %21 = vector.extract_strided_slice %0 {offsets = [0, 10], sizes = [4, 4], strides = [1, 1]} : vector<4x16xf32> to vector<4x4xf32>
    %c0_12 = arith.constant 0 : index
    %c40 = arith.constant 40 : index
    %22 = vector.load %arg15[%c0_12, %c40] : memref<4x52xf32, #tpu.memory_space<vmem>>, vector<4x4xf32>
    tpu.vector_store %arg15[%c0_12, %c40], %21 {strides = array<i32>} : memref<4x52xf32, #tpu.memory_space<vmem>>, vector<4x4xf32>,
    %23 = vector.extract_strided_slice %0 {offsets = [0, 11], sizes = [4, 4], strides = [1, 1]} : vector<4x16xf32> to vector<4x4xf32>
    %c0_13 = arith.constant 0 : index
    %c44 = arith.constant 44 : index
    %24 = vector.load %arg15[%c0_13, %c44] : memref<4x52xf32, #tpu.memory_space<vmem>>, vector<4x4xf32>
    tpu.vector_store %arg15[%c0_13, %c44], %23 {strides = array<i32>} : memref<4x52xf32, #tpu.memory_space<vmem>>, vector<4x4xf32>,
    %25 = vector.extract_strided_slice %0 {offsets = [0, 12], sizes = [4, 4], strides = [1, 1]} : vector<4x16xf32> to vector<4x4xf32>
    %c0_14 = arith.constant 0 : index
    %c48 = arith.constant 48 : index
    %26 = vector.load %arg15[%c0_14, %c48] : memref<4x52xf32, #tpu.memory_space<vmem>>, vector<4x4xf32>
    tpu.vector_store %arg15[%c0_14, %c48], %25 {strides = array<i32>} : memref<4x52xf32, #tpu.memory_space<vmem>>, vector<4x4xf32>,
    %c0_15 = arith.constant 0 : index
    %c0_16 = arith.constant 0 : index
    %27 = vector.load %arg15[%c0_15, %c0_16] : memref<4x52xf32, #tpu.memory_space<vmem>>, vector<4x52xf32>
    %c0_17 = arith.constant 0 : index
    %c0_18 = arith.constant 0 : index
    %28 = vector.load %arg1[%c0_17, %c0_18] : memref<1x52xf32, #tpu.memory_space<vmem>>, vector<1x52xf32>
    %29 = vector.broadcast %28 : vector<1x52xf32> to vector<4x52xf32>
    %30 = arith.addf %27, %29 : vector<4x52xf32>
    %c0_19 = arith.constant 0 : index
    %c0_20 = arith.constant 0 : index
    %31 = vector.load %arg2[%c0_19, %c0_20] : memref<52x52xf32, #tpu.memory_space<vmem>>, vector<52x52xf32>
    %cst = arith.constant dense<0.000000e+00> : vector<4x52xf32>
    %32 = tpu.matmul %30, %31, %cst {dimension_numbers = #tpu.dot_dimension_numbers<[1], [0], [0], [1], [0, 0, 1, 1], [], []>} : vector<4x52xf32>, vector<52x52xf32>, vector<4x52xf32> -> vector<4x52xf32>
    %c0_21 = arith.constant 0 : index
    %c0_22 = arith.constant 0 : index
    %33 = vector.load %arg3[%c0_21, %c0_22] : memref<1x52xf32, #tpu.memory_space<vmem>>, vector<1x52xf32>
    %34 = vector.broadcast %33 : vector<1x52xf32> to vector<4x52xf32>
    %35 = arith.addf %32, %34 : vector<4x52xf32>
    %cst_23 = arith.constant 5.000000e-01 : f32
    %36 = vector.broadcast %cst_23 : f32 to vector<4x52xf32>
    %37 = arith.mulf %36, %35 : vector<4x52xf32>
    %cst_24 = arith.constant 0.707106769 : f32
    %38 = vector.broadcast %cst_24 : f32 to vector<4x52xf32>
    %39 = arith.mulf %35, %38 : vector<4x52xf32>
    %40 = math.absf %39 : vector<4x52xf32>
    %cst_25 = arith.constant 0.327591091 : f32
    %41 = vector.broadcast %cst_25 : f32 to vector<4x52xf32>
    %42 = arith.mulf %41, %40 : vector<4x52xf32>
    %cst_26 = arith.constant 1.000000e+00 : f32
    %43 = vector.broadcast %cst_26 : f32 to vector<4x52xf32>
    %44 = arith.addf %43, %42 : vector<4x52xf32>
    %cst_27 = arith.constant 1.000000e+00 : f32
    %45 = vector.broadcast %cst_27 : f32 to vector<4x52xf32>
    %46 = arith.divf %45, %44 : vector<4x52xf32>
    %cst_28 = arith.constant 1.06140542 : f32
    %47 = vector.broadcast %cst_28 : f32 to vector<4x52xf32>
    %48 = arith.mulf %47, %46 : vector<4x52xf32>
    %cst_29 = arith.constant -1.45315206 : f32
    %49 = vector.broadcast %cst_29 : f32 to vector<4x52xf32>
    %50 = arith.addf %48, %49 : vector<4x52xf32>
    %51 = arith.mulf %50, %46 : vector<4x52xf32>
    %cst_30 = arith.constant 1.42141378 : f32
    %52 = vector.broadcast %cst_30 : f32 to vector<4x52xf32>
    %53 = arith.addf %51, %52 : vector<4x52xf32>
    %54 = arith.mulf %53, %46 : vector<4x52xf32>
    %cst_31 = arith.constant -0.284496725 : f32
    %55 = vector.broadcast %cst_31 : f32 to vector<4x52xf32>
    %56 = arith.addf %54, %55 : vector<4x52xf32>
    %57 = arith.mulf %56, %46 : vector<4x52xf32>
    %cst_32 = arith.constant 0.254829586 : f32
    %58 = vector.broadcast %cst_32 : f32 to vector<4x52xf32>
    %59 = arith.addf %57, %58 : vector<4x52xf32>
    %60 = arith.mulf %59, %46 : vector<4x52xf32>
    %cst_33 = arith.constant 0.000000e+00 : f32
    %61 = vector.broadcast %cst_33 : f32 to vector<4x52xf32>
    %62 = arith.subf %61, %40 : vector<4x52xf32>
    %63 = arith.mulf %62, %40 : vector<4x52xf32>
    %64 = math.exp %63 : vector<4x52xf32>
    %65 = arith.mulf %60, %64 : vector<4x52xf32>
    %cst_34 = arith.constant 1.000000e+00 : f32
    %66 = vector.broadcast %cst_34 : f32 to vector<4x52xf32>
    %67 = arith.subf %66, %65 : vector<4x52xf32>
    %cst_35 = arith.constant 0.000000e+00 : f32
    %68 = vector.broadcast %cst_35 : f32 to vector<4x52xf32>
    %69 = arith.cmpf oge, %39, %68 : vector<4x52xf32>
    %cst_36 = arith.constant 0.000000e+00 : f32
    %70 = vector.broadcast %cst_36 : f32 to vector<4x52xf32>
    %71 = arith.subf %70, %67 : vector<4x52xf32>
    %72 = arith.select %69, %67, %71 : vector<4x52xi1>, vector<4x52xf32>
    %cst_37 = arith.constant 1.000000e+00 : f32
    %73 = vector.broadcast %cst_37 : f32 to vector<4x52xf32>
    %74 = arith.addf %73, %72 : vector<4x52xf32>
    %75 = arith.mulf %37, %74 : vector<4x52xf32>
    %c0_38 = arith.constant 0 : index
    %c0_39 = arith.constant 0 : index
    %76 = vector.load %arg4[%c0_38, %c0_39] : memref<1x52xf32, #tpu.memory_space<vmem>>, vector<1x52xf32>
    %77 = vector.broadcast %76 : vector<1x52xf32> to vector<4x52xf32>
    %78 = arith.mulf %75, %77 : vector<4x52xf32>
    %c0_40 = arith.constant 0 : index
    %c0_41 = arith.constant 0 : index
    %79 = vector.load %arg5[%c0_40, %c0_41] : memref<1x52xf32, #tpu.memory_space<vmem>>, vector<1x52xf32>
    %80 = vector.broadcast %79 : vector<1x52xf32> to vector<4x52xf32>
    %81 = arith.addf %78, %80 : vector<4x52xf32>
    %c0_42 = arith.constant 0 : index
    %c0_43 = arith.constant 0 : index
    %82 = vector.load %arg6[%c0_42, %c0_43] : memref<52x208xf32, #tpu.memory_space<vmem>>, vector<52x208xf32>
    %cst_44 = arith.constant dense<0.000000e+00> : vector<4x208xf32>
    %83 = tpu.matmul %81, %82, %cst_44 {dimension_numbers = #tpu.dot_dimension_numbers<[1], [0], [0], [1], [0, 0, 1, 1], [], []>} : vector<4x52xf32>, vector<52x208xf32>, vector<4x208xf32> -> vector<4x208xf32>
    %c0_45 = arith.constant 0 : index
    %c0_46 = arith.constant 0 : index
    %84 = vector.load %arg7[%c0_45, %c0_46] : memref<4x16xf32, #tpu.memory_space<vmem>>, vector<4x16xf32>
    %85 = vector.extract_strided_slice %84 {offsets = [0, 0], sizes = [1, 16], strides = [1, 1]} : vector<4x16xf32> to vector<1x16xf32>
    %86 = vector.extract_strided_slice %84 {offsets = [1, 0], sizes = [1, 16], strides = [1, 1]} : vector<4x16xf32> to vector<1x16xf32>
    %87 = vector.extract_strided_slice %84 {offsets = [2, 0], sizes = [1, 16], strides = [1, 1]} : vector<4x16xf32> to vector<1x16xf32>
    %88 = vector.extract_strided_slice %84 {offsets = [3, 0], sizes = [1, 16], strides = [1, 1]} : vector<4x16xf32> to vector<1x16xf32>
    %cst_47 = arith.constant 0.000000e+00 : f32
    %89 = vector.broadcast %cst_47 : f32 to vector<4x4xf32>
    %cst_48 = arith.constant 0.000000e+00 : f32
    %90 = vector.broadcast %cst_48 : f32 to vector<4x4xf32>
    %91 = vector.extract_strided_slice %83 {offsets = [0, 0], sizes = [4, 16], strides = [1, 1]} : vector<4x208xf32> to vector<4x16xf32>
    %92 = vector.extract_strided_slice %89 {offsets = [0, 0], sizes = [4, 1], strides = [1, 1]} : vector<4x4xf32> to vector<4x1xf32>
    %93 = vector.broadcast %92 : vector<4x1xf32> to vector<4x16xf32>
    %94 = vector.broadcast %85 : vector<1x16xf32> to vector<4x16xf32>
    %95 = arith.mulf %93, %94 : vector<4x16xf32>
    %96 = arith.addf %91, %95 : vector<4x16xf32>
    %97 = vector.extract_strided_slice %89 {offsets = [0, 1], sizes = [4, 1], strides = [1, 1]} : vector<4x4xf32> to vector<4x1xf32>
    %98 = vector.broadcast %97 : vector<4x1xf32> to vector<4x16xf32>
    %99 = vector.broadcast %86 : vector<1x16xf32> to vector<4x16xf32>
    %100 = arith.mulf %98, %99 : vector<4x16xf32>
    %101 = arith.addf %96, %100 : vector<4x16xf32>
    %102 = vector.extract_strided_slice %89 {offsets = [0, 2], sizes = [4, 1], strides = [1, 1]} : vector<4x4xf32> to vector<4x1xf32>
    %103 = vector.broadcast %102 : vector<4x1xf32> to vector<4x16xf32>
    %104 = vector.broadcast %87 : vector<1x16xf32> to vector<4x16xf32>
    %105 = arith.mulf %103, %104 : vector<4x16xf32>
    %106 = arith.addf %101, %105 : vector<4x16xf32>
    %107 = vector.extract_strided_slice %89 {offsets = [0, 3], sizes = [4, 1], strides = [1, 1]} : vector<4x4xf32> to vector<4x1xf32>
    %108 = vector.broadcast %107 : vector<4x1xf32> to vector<4x16xf32>
    %109 = vector.broadcast %88 : vector<1x16xf32> to vector<4x16xf32>
    %110 = arith.mulf %108, %109 : vector<4x16xf32>
    %111 = arith.addf %106, %110 : vector<4x16xf32>
    %112 = arith.negf %111 : vector<4x16xf32>
    %113 = math.exp %112 : vector<4x16xf32>
    %cst_49 = arith.constant 1.000000e+00 : f32
    %114 = vector.broadcast %cst_49 : f32 to vector<4x16xf32>
    %115 = arith.addf %114, %113 : vector<4x16xf32>
    %116 = arith.divf %114, %115 : vector<4x16xf32>
    %117 = vector.extract_strided_slice %111 {offsets = [0, 8], sizes = [4, 4], strides = [1, 1]} : vector<4x16xf32> to vector<4x4xf32>
    %118 = math.tanh %117 : vector<4x4xf32>
    %119 = vector.extract_strided_slice %116 {offsets = [0, 4], sizes = [4, 4], strides = [1, 1]} : vector<4x16xf32> to vector<4x4xf32>
    %120 = arith.mulf %119, %90 : vector<4x4xf32>
    %121 = vector.extract_strided_slice %116 {offsets = [0, 0], sizes = [4, 4], strides = [1, 1]} : vector<4x16xf32> to vector<4x4xf32>
    %122 = arith.mulf %121, %118 : vector<4x4xf32>
    %123 = arith.addf %120, %122 : vector<4x4xf32>
    %124 = vector.extract_strided_slice %116 {offsets = [0, 12], sizes = [4, 4], strides = [1, 1]} : vector<4x16xf32> to vector<4x4xf32>
    %125 = math.tanh %123 : vector<4x4xf32>
    %126 = arith.mulf %124, %125 : vector<4x4xf32>
    %c0_50 = arith.constant 0 : index
    %c0_51 = arith.constant 0 : index
    %127 = vector.load %arg16[%c0_50, %c0_51] : memref<4x52xf32, #tpu.memory_space<vmem>>, vector<4x4xf32>
    tpu.vector_store %arg16[%c0_50, %c0_51], %126 {strides = array<i32>} : memref<4x52xf32, #tpu.memory_space<vmem>>, vector<4x4xf32>,
    %128 = vector.extract_strided_slice %83 {offsets = [0, 16], sizes = [4, 16], strides = [1, 1]} : vector<4x208xf32> to vector<4x16xf32>
    %129 = vector.extract_strided_slice %126 {offsets = [0, 0], sizes = [4, 1], strides = [1, 1]} : vector<4x4xf32> to vector<4x1xf32>
    %130 = vector.broadcast %129 : vector<4x1xf32> to vector<4x16xf32>
    %131 = vector.broadcast %85 : vector<1x16xf32> to vector<4x16xf32>
    %132 = arith.mulf %130, %131 : vector<4x16xf32>
    %133 = arith.addf %128, %132 : vector<4x16xf32>
    %134 = vector.extract_strided_slice %126 {offsets = [0, 1], sizes = [4, 1], strides = [1, 1]} : vector<4x4xf32> to vector<4x1xf32>
    %135 = vector.broadcast %134 : vector<4x1xf32> to vector<4x16xf32>
    %136 = vector.broadcast %86 : vector<1x16xf32> to vector<4x16xf32>
    %137 = arith.mulf %135, %136 : vector<4x16xf32>
    %138 = arith.addf %133, %137 : vector<4x16xf32>
    %139 = vector.extract_strided_slice %126 {offsets = [0, 2], sizes = [4, 1], strides = [1, 1]} : vector<4x4xf32> to vector<4x1xf32>
    %140 = vector.broadcast %139 : vector<4x1xf32> to vector<4x16xf32>
    %141 = vector.broadcast %87 : vector<1x16xf32> to vector<4x16xf32>
    %142 = arith.mulf %140, %141 : vector<4x16xf32>
    %143 = arith.addf %138, %142 : vector<4x16xf32>
    %144 = vector.extract_strided_slice %126 {offsets = [0, 3], sizes = [4, 1], strides = [1, 1]} : vector<4x4xf32> to vector<4x1xf32>
    %145 = vector.broadcast %144 : vector<4x1xf32> to vector<4x16xf32>
    %146 = vector.broadcast %88 : vector<1x16xf32> to vector<4x16xf32>
    %147 = arith.mulf %145, %146 : vector<4x16xf32>
    %148 = arith.addf %143, %147 : vector<4x16xf32>
    %149 = arith.negf %148 : vector<4x16xf32>
    %150 = math.exp %149 : vector<4x16xf32>
    %cst_52 = arith.constant 1.000000e+00 : f32
    %151 = vector.broadcast %cst_52 : f32 to vector<4x16xf32>
    %152 = arith.addf %151, %150 : vector<4x16xf32>
    %153 = arith.divf %151, %152 : vector<4x16xf32>
    %154 = vector.extract_strided_slice %148 {offsets = [0, 8], sizes = [4, 4], strides = [1, 1]} : vector<4x16xf32> to vector<4x4xf32>
    %155 = math.tanh %154 : vector<4x4xf32>
    %156 = vector.extract_strided_slice %153 {offsets = [0, 4], sizes = [4, 4], strides = [1, 1]} : vector<4x16xf32> to vector<4x4xf32>
    %157 = arith.mulf %156, %123 : vector<4x4xf32>
    %158 = vector.extract_strided_slice %153 {offsets = [0, 0], sizes = [4, 4], strides = [1, 1]} : vector<4x16xf32> to vector<4x4xf32>
    %159 = arith.mulf %158, %155 : vector<4x4xf32>
    %160 = arith.addf %157, %159 : vector<4x4xf32>
    %161 = vector.extract_strided_slice %153 {offsets = [0, 12], sizes = [4, 4], strides = [1, 1]} : vector<4x16xf32> to vector<4x4xf32>
    %162 = math.tanh %160 : vector<4x4xf32>
    %163 = arith.mulf %161, %162 : vector<4x4xf32>
    %c0_53 = arith.constant 0 : index
    %c4_54 = arith.constant 4 : index
    %164 = vector.load %arg16[%c0_53, %c4_54] : memref<4x52xf32, #tpu.memory_space<vmem>>, vector<4x4xf32>
    tpu.vector_store %arg16[%c0_53, %c4_54], %163 {strides = array<i32>} : memref<4x52xf32, #tpu.memory_space<vmem>>, vector<4x4xf32>,
    %165 = vector.extract_strided_slice %83 {offsets = [0, 32], sizes = [4, 16], strides = [1, 1]} : vector<4x208xf32> to vector<4x16xf32>
    %166 = vector.extract_strided_slice %163 {offsets = [0, 0], sizes = [4, 1], strides = [1, 1]} : vector<4x4xf32> to vector<4x1xf32>
    %167 = vector.broadcast %166 : vector<4x1xf32> to vector<4x16xf32>
    %168 = vector.broadcast %85 : vector<1x16xf32> to vector<4x16xf32>
    %169 = arith.mulf %167, %168 : vector<4x16xf32>
    %170 = arith.addf %165, %169 : vector<4x16xf32>
    %171 = vector.extract_strided_slice %163 {offsets = [0, 1], sizes = [4, 1], strides = [1, 1]} : vector<4x4xf32> to vector<4x1xf32>
    %172 = vector.broadcast %171 : vector<4x1xf32> to vector<4x16xf32>
    %173 = vector.broadcast %86 : vector<1x16xf32> to vector<4x16xf32>
    %174 = arith.mulf %172, %173 : vector<4x16xf32>
    %175 = arith.addf %170, %174 : vector<4x16xf32>
    %176 = vector.extract_strided_slice %163 {offsets = [0, 2], sizes = [4, 1], strides = [1, 1]} : vector<4x4xf32> to vector<4x1xf32>
    %177 = vector.broadcast %176 : vector<4x1xf32> to vector<4x16xf32>
    %178 = vector.broadcast %87 : vector<1x16xf32> to vector<4x16xf32>
    %179 = arith.mulf %177, %178 : vector<4x16xf32>
    %180 = arith.addf %175, %179 : vector<4x16xf32>
    %181 = vector.extract_strided_slice %163 {offsets = [0, 3], sizes = [4, 1], strides = [1, 1]} : vector<4x4xf32> to vector<4x1xf32>
    %182 = vector.broadcast %181 : vector<4x1xf32> to vector<4x16xf32>
    %183 = vector.broadcast %88 : vector<1x16xf32> to vector<4x16xf32>
    %184 = arith.mulf %182, %183 : vector<4x16xf32>
    %185 = arith.addf %180, %184 : vector<4x16xf32>
    %186 = arith.negf %185 : vector<4x16xf32>
    %187 = math.exp %186 : vector<4x16xf32>
    %cst_55 = arith.constant 1.000000e+00 : f32
    %188 = vector.broadcast %cst_55 : f32 to vector<4x16xf32>
    %189 = arith.addf %188, %187 : vector<4x16xf32>
    %190 = arith.divf %188, %189 : vector<4x16xf32>
    %191 = vector.extract_strided_slice %185 {offsets = [0, 8], sizes = [4, 4], strides = [1, 1]} : vector<4x16xf32> to vector<4x4xf32>
    %192 = math.tanh %191 : vector<4x4xf32>
    %193 = vector.extract_strided_slice %190 {offsets = [0, 4], sizes = [4, 4], strides = [1, 1]} : vector<4x16xf32> to vector<4x4xf32>
    %194 = arith.mulf %193, %160 : vector<4x4xf32>
    %195 = vector.extract_strided_slice %190 {offsets = [0, 0], sizes = [4, 4], strides = [1, 1]} : vector<4x16xf32> to vector<4x4xf32>
    %196 = arith.mulf %195, %192 : vector<4x4xf32>
    %197 = arith.addf %194, %196 : vector<4x4xf32>
    %198 = vector.extract_strided_slice %190 {offsets = [0, 12], sizes = [4, 4], strides = [1, 1]} : vector<4x16xf32> to vector<4x4xf32>
    %199 = math.tanh %197 : vector<4x4xf32>
    %200 = arith.mulf %198, %199 : vector<4x4xf32>
    %c0_56 = arith.constant 0 : index
    %c8_57 = arith.constant 8 : index
    %201 = vector.load %arg16[%c0_56, %c8_57] : memref<4x52xf32, #tpu.memory_space<vmem>>, vector<4x4xf32>
    tpu.vector_store %arg16[%c0_56, %c8_57], %200 {strides = array<i32>} : memref<4x52xf32, #tpu.memory_space<vmem>>, vector<4x4xf32>,
    %202 = vector.extract_strided_slice %83 {offsets = [0, 48], sizes = [4, 16], strides = [1, 1]} : vector<4x208xf32> to vector<4x16xf32>
    %203 = vector.extract_strided_slice %200 {offsets = [0, 0], sizes = [4, 1], strides = [1, 1]} : vector<4x4xf32> to vector<4x1xf32>
    %204 = vector.broadcast %203 : vector<4x1xf32> to vector<4x16xf32>
    %205 = vector.broadcast %85 : vector<1x16xf32> to vector<4x16xf32>
    %206 = arith.mulf %204, %205 : vector<4x16xf32>
    %207 = arith.addf %202, %206 : vector<4x16xf32>
    %208 = vector.extract_strided_slice %200 {offsets = [0, 1], sizes = [4, 1], strides = [1, 1]} : vector<4x4xf32> to vector<4x1xf32>
    %209 = vector.broadcast %208 : vector<4x1xf32> to vector<4x16xf32>
    %210 = vector.broadcast %86 : vector<1x16xf32> to vector<4x16xf32>
    %211 = arith.mulf %209, %210 : vector<4x16xf32>
    %212 = arith.addf %207, %211 : vector<4x16xf32>
    %213 = vector.extract_strided_slice %200 {offsets = [0, 2], sizes = [4, 1], strides = [1, 1]} : vector<4x4xf32> to vector<4x1xf32>
    %214 = vector.broadcast %213 : vector<4x1xf32> to vector<4x16xf32>
    %215 = vector.broadcast %87 : vector<1x16xf32> to vector<4x16xf32>
    %216 = arith.mulf %214, %215 : vector<4x16xf32>
    %217 = arith.addf %212, %216 : vector<4x16xf32>
    %218 = vector.extract_strided_slice %200 {offsets = [0, 3], sizes = [4, 1], strides = [1, 1]} : vector<4x4xf32> to vector<4x1xf32>
    %219 = vector.broadcast %218 : vector<4x1xf32> to vector<4x16xf32>
    %220 = vector.broadcast %88 : vector<1x16xf32> to vector<4x16xf32>
    %221 = arith.mulf %219, %220 : vector<4x16xf32>
    %222 = arith.addf %217, %221 : vector<4x16xf32>
    %223 = arith.negf %222 : vector<4x16xf32>
    %224 = math.exp %223 : vector<4x16xf32>
    %cst_58 = arith.constant 1.000000e+00 : f32
    %225 = vector.broadcast %cst_58 : f32 to vector<4x16xf32>
    %226 = arith.addf %225, %224 : vector<4x16xf32>
    %227 = arith.divf %225, %226 : vector<4x16xf32>
    %228 = vector.extract_strided_slice %222 {offsets = [0, 8], sizes = [4, 4], strides = [1, 1]} : vector<4x16xf32> to vector<4x4xf32>
    %229 = math.tanh %228 : vector<4x4xf32>
    %230 = vector.extract_strided_slice %227 {offsets = [0, 4], sizes = [4, 4], strides = [1, 1]} : vector<4x16xf32> to vector<4x4xf32>
    %231 = arith.mulf %230, %197 : vector<4x4xf32>
    %232 = vector.extract_strided_slice %227 {offsets = [0, 0], sizes = [4, 4], strides = [1, 1]} : vector<4x16xf32> to vector<4x4xf32>
    %233 = arith.mulf %232, %229 : vector<4x4xf32>
    %234 = arith.addf %231, %233 : vector<4x4xf32>
    %235 = vector.extract_strided_slice %227 {offsets = [0, 12], sizes = [4, 4], strides = [1, 1]} : vector<4x16xf32> to vector<4x4xf32>
    %236 = math.tanh %234 : vector<4x4xf32>
    %237 = arith.mulf %235, %236 : vector<4x4xf32>
    %c0_59 = arith.constant 0 : index
    %c12_60 = arith.constant 12 : index
    %238 = vector.load %arg16[%c0_59, %c12_60] : memref<4x52xf32, #tpu.memory_space<vmem>>, vector<4x4xf32>
    tpu.vector_store %arg16[%c0_59, %c12_60], %237 {strides = array<i32>} : memref<4x52xf32, #tpu.memory_space<vmem>>, vector<4x4xf32>,
    %239 = vector.extract_strided_slice %83 {offsets = [0, 64], sizes = [4, 16], strides = [1, 1]} : vector<4x208xf32> to vector<4x16xf32>
    %240 = vector.extract_strided_slice %237 {offsets = [0, 0], sizes = [4, 1], strides = [1, 1]} : vector<4x4xf32> to vector<4x1xf32>
    %241 = vector.broadcast %240 : vector<4x1xf32> to vector<4x16xf32>
    %242 = vector.broadcast %85 : vector<1x16xf32> to vector<4x16xf32>
    %243 = arith.mulf %241, %242 : vector<4x16xf32>
    %244 = arith.addf %239, %243 : vector<4x16xf32>
    %245 = vector.extract_strided_slice %237 {offsets = [0, 1], sizes = [4, 1], strides = [1, 1]} : vector<4x4xf32> to vector<4x1xf32>
    %246 = vector.broadcast %245 : vector<4x1xf32> to vector<4x16xf32>
    %247 = vector.broadcast %86 : vector<1x16xf32> to vector<4x16xf32>
    %248 = arith.mulf %246, %247 : vector<4x16xf32>
    %249 = arith.addf %244, %248 : vector<4x16xf32>
    %250 = vector.extract_strided_slice %237 {offsets = [0, 2], sizes = [4, 1], strides = [1, 1]} : vector<4x4xf32> to vector<4x1xf32>
    %251 = vector.broadcast %250 : vector<4x1xf32> to vector<4x16xf32>
    %252 = vector.broadcast %87 : vector<1x16xf32> to vector<4x16xf32>
    %253 = arith.mulf %251, %252 : vector<4x16xf32>
    %254 = arith.addf %249, %253 : vector<4x16xf32>
    %255 = vector.extract_strided_slice %237 {offsets = [0, 3], sizes = [4, 1], strides = [1, 1]} : vector<4x4xf32> to vector<4x1xf32>
    %256 = vector.broadcast %255 : vector<4x1xf32> to vector<4x16xf32>
    %257 = vector.broadcast %88 : vector<1x16xf32> to vector<4x16xf32>
    %258 = arith.mulf %256, %257 : vector<4x16xf32>
    %259 = arith.addf %254, %258 : vector<4x16xf32>
    %260 = arith.negf %259 : vector<4x16xf32>
    %261 = math.exp %260 : vector<4x16xf32>
    %cst_61 = arith.constant 1.000000e+00 : f32
    %262 = vector.broadcast %cst_61 : f32 to vector<4x16xf32>
    %263 = arith.addf %262, %261 : vector<4x16xf32>
    %264 = arith.divf %262, %263 : vector<4x16xf32>
    %265 = vector.extract_strided_slice %259 {offsets = [0, 8], sizes = [4, 4], strides = [1, 1]} : vector<4x16xf32> to vector<4x4xf32>
    %266 = math.tanh %265 : vector<4x4xf32>
    %267 = vector.extract_strided_slice %264 {offsets = [0, 4], sizes = [4, 4], strides = [1, 1]} : vector<4x16xf32> to vector<4x4xf32>
    %268 = arith.mulf %267, %234 : vector<4x4xf32>
    %269 = vector.extract_strided_slice %264 {offsets = [0, 0], sizes = [4, 4], strides = [1, 1]} : vector<4x16xf32> to vector<4x4xf32>
    %270 = arith.mulf %269, %266 : vector<4x4xf32>
    %271 = arith.addf %268, %270 : vector<4x4xf32>
    %272 = vector.extract_strided_slice %264 {offsets = [0, 12], sizes = [4, 4], strides = [1, 1]} : vector<4x16xf32> to vector<4x4xf32>
    %273 = math.tanh %271 : vector<4x4xf32>
    %274 = arith.mulf %272, %273 : vector<4x4xf32>
    %c0_62 = arith.constant 0 : index
    %c16_63 = arith.constant 16 : index
    %275 = vector.load %arg16[%c0_62, %c16_63] : memref<4x52xf32, #tpu.memory_space<vmem>>, vector<4x4xf32>
    tpu.vector_store %arg16[%c0_62, %c16_63], %274 {strides = array<i32>} : memref<4x52xf32, #tpu.memory_space<vmem>>, vector<4x4xf32>,
    %276 = vector.extract_strided_slice %83 {offsets = [0, 80], sizes = [4, 16], strides = [1, 1]} : vector<4x208xf32> to vector<4x16xf32>
    %277 = vector.extract_strided_slice %274 {offsets = [0, 0], sizes = [4, 1], strides = [1, 1]} : vector<4x4xf32> to vector<4x1xf32>
    %278 = vector.broadcast %277 : vector<4x1xf32> to vector<4x16xf32>
    %279 = vector.broadcast %85 : vector<1x16xf32> to vector<4x16xf32>
    %280 = arith.mulf %278, %279 : vector<4x16xf32>
    %281 = arith.addf %276, %280 : vector<4x16xf32>
    %282 = vector.extract_strided_slice %274 {offsets = [0, 1], sizes = [4, 1], strides = [1, 1]} : vector<4x4xf32> to vector<4x1xf32>
    %283 = vector.broadcast %282 : vector<4x1xf32> to vector<4x16xf32>
    %284 = vector.broadcast %86 : vector<1x16xf32> to vector<4x16xf32>
    %285 = arith.mulf %283, %284 : vector<4x16xf32>
    %286 = arith.addf %281, %285 : vector<4x16xf32>
    %287 = vector.extract_strided_slice %274 {offsets = [0, 2], sizes = [4, 1], strides = [1, 1]} : vector<4x4xf32> to vector<4x1xf32>
    %288 = vector.broadcast %287 : vector<4x1xf32> to vector<4x16xf32>
    %289 = vector.broadcast %87 : vector<1x16xf32> to vector<4x16xf32>
    %290 = arith.mulf %288, %289 : vector<4x16xf32>
    %291 = arith.addf %286, %290 : vector<4x16xf32>
    %292 = vector.extract_strided_slice %274 {offsets = [0, 3], sizes = [4, 1], strides = [1, 1]} : vector<4x4xf32> to vector<4x1xf32>
    %293 = vector.broadcast %292 : vector<4x1xf32> to vector<4x16xf32>
    %294 = vector.broadcast %88 : vector<1x16xf32> to vector<4x16xf32>
    %295 = arith.mulf %293, %294 : vector<4x16xf32>
    %296 = arith.addf %291, %295 : vector<4x16xf32>
    %297 = arith.negf %296 : vector<4x16xf32>
    %298 = math.exp %297 : vector<4x16xf32>
    %cst_64 = arith.constant 1.000000e+00 : f32
    %299 = vector.broadcast %cst_64 : f32 to vector<4x16xf32>
    %300 = arith.addf %299, %298 : vector<4x16xf32>
    %301 = arith.divf %299, %300 : vector<4x16xf32>
    %302 = vector.extract_strided_slice %296 {offsets = [0, 8], sizes = [4, 4], strides = [1, 1]} : vector<4x16xf32> to vector<4x4xf32>
    %303 = math.tanh %302 : vector<4x4xf32>
    %304 = vector.extract_strided_slice %301 {offsets = [0, 4], sizes = [4, 4], strides = [1, 1]} : vector<4x16xf32> to vector<4x4xf32>
    %305 = arith.mulf %304, %271 : vector<4x4xf32>
    %306 = vector.extract_strided_slice %301 {offsets = [0, 0], sizes = [4, 4], strides = [1, 1]} : vector<4x16xf32> to vector<4x4xf32>
    %307 = arith.mulf %306, %303 : vector<4x4xf32>
    %308 = arith.addf %305, %307 : vector<4x4xf32>
    %309 = vector.extract_strided_slice %301 {offsets = [0, 12], sizes = [4, 4], strides = [1, 1]} : vector<4x16xf32> to vector<4x4xf32>
    %310 = math.tanh %308 : vector<4x4xf32>
    %311 = arith.mulf %309, %310 : vector<4x4xf32>
    %c0_65 = arith.constant 0 : index
    %c20_66 = arith.constant 20 : index
    %312 = vector.load %arg16[%c0_65, %c20_66] : memref<4x52xf32, #tpu.memory_space<vmem>>, vector<4x4xf32>
    tpu.vector_store %arg16[%c0_65, %c20_66], %311 {strides = array<i32>} : memref<4x52xf32, #tpu.memory_space<vmem>>, vector<4x4xf32>,
    %313 = vector.extract_strided_slice %83 {offsets = [0, 96], sizes = [4, 16], strides = [1, 1]} : vector<4x208xf32> to vector<4x16xf32>
    %314 = vector.extract_strided_slice %311 {offsets = [0, 0], sizes = [4, 1], strides = [1, 1]} : vector<4x4xf32> to vector<4x1xf32>
    %315 = vector.broadcast %314 : vector<4x1xf32> to vector<4x16xf32>
    %316 = vector.broadcast %85 : vector<1x16xf32> to vector<4x16xf32>
    %317 = arith.mulf %315, %316 : vector<4x16xf32>
    %318 = arith.addf %313, %317 : vector<4x16xf32>
    %319 = vector.extract_strided_slice %311 {offsets = [0, 1], sizes = [4, 1], strides = [1, 1]} : vector<4x4xf32> to vector<4x1xf32>
    %320 = vector.broadcast %319 : vector<4x1xf32> to vector<4x16xf32>
    %321 = vector.broadcast %86 : vector<1x16xf32> to vector<4x16xf32>
    %322 = arith.mulf %320, %321 : vector<4x16xf32>
    %323 = arith.addf %318, %322 : vector<4x16xf32>
    %324 = vector.extract_strided_slice %311 {offsets = [0, 2], sizes = [4, 1], strides = [1, 1]} : vector<4x4xf32> to vector<4x1xf32>
    %325 = vector.broadcast %324 : vector<4x1xf32> to vector<4x16xf32>
    %326 = vector.broadcast %87 : vector<1x16xf32> to vector<4x16xf32>
    %327 = arith.mulf %325, %326 : vector<4x16xf32>
    %328 = arith.addf %323, %327 : vector<4x16xf32>
    %329 = vector.extract_strided_slice %311 {offsets = [0, 3], sizes = [4, 1], strides = [1, 1]} : vector<4x4xf32> to vector<4x1xf32>
    %330 = vector.broadcast %329 : vector<4x1xf32> to vector<4x16xf32>
    %331 = vector.broadcast %88 : vector<1x16xf32> to vector<4x16xf32>
    %332 = arith.mulf %330, %331 : vector<4x16xf32>
    %333 = arith.addf %328, %332 : vector<4x16xf32>
    %334 = arith.negf %333 : vector<4x16xf32>
    %335 = math.exp %334 : vector<4x16xf32>
    %cst_67 = arith.constant 1.000000e+00 : f32
    %336 = vector.broadcast %cst_67 : f32 to vector<4x16xf32>
    %337 = arith.addf %336, %335 : vector<4x16xf32>
    %338 = arith.divf %336, %337 : vector<4x16xf32>
    %339 = vector.extract_strided_slice %333 {offsets = [0, 8], sizes = [4, 4], strides = [1, 1]} : vector<4x16xf32> to vector<4x4xf32>
    %340 = math.tanh %339 : vector<4x4xf32>
    %341 = vector.extract_strided_slice %338 {offsets = [0, 4], sizes = [4, 4], strides = [1, 1]} : vector<4x16xf32> to vector<4x4xf32>
    %342 = arith.mulf %341, %308 : vector<4x4xf32>
    %343 = vector.extract_strided_slice %338 {offsets = [0, 0], sizes = [4, 4], strides = [1, 1]} : vector<4x16xf32> to vector<4x4xf32>
    %344 = arith.mulf %343, %340 : vector<4x4xf32>
    %345 = arith.addf %342, %344 : vector<4x4xf32>
    %346 = vector.extract_strided_slice %338 {offsets = [0, 12], sizes = [4, 4], strides = [1, 1]} : vector<4x16xf32> to vector<4x4xf32>
    %347 = math.tanh %345 : vector<4x4xf32>
    %348 = arith.mulf %346, %347 : vector<4x4xf32>
    %c0_68 = arith.constant 0 : index
    %c24_69 = arith.constant 24 : index
    %349 = vector.load %arg16[%c0_68, %c24_69] : memref<4x52xf32, #tpu.memory_space<vmem>>, vector<4x4xf32>
    tpu.vector_store %arg16[%c0_68, %c24_69], %348 {strides = array<i32>} : memref<4x52xf32, #tpu.memory_space<vmem>>, vector<4x4xf32>,
    %350 = vector.extract_strided_slice %83 {offsets = [0, 112], sizes = [4, 16], strides = [1, 1]} : vector<4x208xf32> to vector<4x16xf32>
    %351 = vector.extract_strided_slice %348 {offsets = [0, 0], sizes = [4, 1], strides = [1, 1]} : vector<4x4xf32> to vector<4x1xf32>
    %352 = vector.broadcast %351 : vector<4x1xf32> to vector<4x16xf32>
    %353 = vector.broadcast %85 : vector<1x16xf32> to vector<4x16xf32>
    %354 = arith.mulf %352, %353 : vector<4x16xf32>
    %355 = arith.addf %350, %354 : vector<4x16xf32>
    %356 = vector.extract_strided_slice %348 {offsets = [0, 1], sizes = [4, 1], strides = [1, 1]} : vector<4x4xf32> to vector<4x1xf32>
    %357 = vector.broadcast %356 : vector<4x1xf32> to vector<4x16xf32>
    %358 = vector.broadcast %86 : vector<1x16xf32> to vector<4x16xf32>
    %359 = arith.mulf %357, %358 : vector<4x16xf32>
    %360 = arith.addf %355, %359 : vector<4x16xf32>
    %361 = vector.extract_strided_slice %348 {offsets = [0, 2], sizes = [4, 1], strides = [1, 1]} : vector<4x4xf32> to vector<4x1xf32>
    %362 = vector.broadcast %361 : vector<4x1xf32> to vector<4x16xf32>
    %363 = vector.broadcast %87 : vector<1x16xf32> to vector<4x16xf32>
    %364 = arith.mulf %362, %363 : vector<4x16xf32>
    %365 = arith.addf %360, %364 : vector<4x16xf32>
    %366 = vector.extract_strided_slice %348 {offsets = [0, 3], sizes = [4, 1], strides = [1, 1]} : vector<4x4xf32> to vector<4x1xf32>
    %367 = vector.broadcast %366 : vector<4x1xf32> to vector<4x16xf32>
    %368 = vector.broadcast %88 : vector<1x16xf32> to vector<4x16xf32>
    %369 = arith.mulf %367, %368 : vector<4x16xf32>
    %370 = arith.addf %365, %369 : vector<4x16xf32>
    %371 = arith.negf %370 : vector<4x16xf32>
    %372 = math.exp %371 : vector<4x16xf32>
    %cst_70 = arith.constant 1.000000e+00 : f32
    %373 = vector.broadcast %cst_70 : f32 to vector<4x16xf32>
    %374 = arith.addf %373, %372 : vector<4x16xf32>
    %375 = arith.divf %373, %374 : vector<4x16xf32>
    %376 = vector.extract_strided_slice %370 {offsets = [0, 8], sizes = [4, 4], strides = [1, 1]} : vector<4x16xf32> to vector<4x4xf32>
    %377 = math.tanh %376 : vector<4x4xf32>
    %378 = vector.extract_strided_slice %375 {offsets = [0, 4], sizes = [4, 4], strides = [1, 1]} : vector<4x16xf32> to vector<4x4xf32>
    %379 = arith.mulf %378, %345 : vector<4x4xf32>
    %380 = vector.extract_strided_slice %375 {offsets = [0, 0], sizes = [4, 4], strides = [1, 1]} : vector<4x16xf32> to vector<4x4xf32>
    %381 = arith.mulf %380, %377 : vector<4x4xf32>
    %382 = arith.addf %379, %381 : vector<4x4xf32>
    %383 = vector.extract_strided_slice %375 {offsets = [0, 12], sizes = [4, 4], strides = [1, 1]} : vector<4x16xf32> to vector<4x4xf32>
    %384 = math.tanh %382 : vector<4x4xf32>
    %385 = arith.mulf %383, %384 : vector<4x4xf32>
    %c0_71 = arith.constant 0 : index
    %c28_72 = arith.constant 28 : index
    %386 = vector.load %arg16[%c0_71, %c28_72] : memref<4x52xf32, #tpu.memory_space<vmem>>, vector<4x4xf32>
    tpu.vector_store %arg16[%c0_71, %c28_72], %385 {strides = array<i32>} : memref<4x52xf32, #tpu.memory_space<vmem>>, vector<4x4xf32>,
    %387 = vector.extract_strided_slice %83 {offsets = [0, 128], sizes = [4, 16], strides = [1, 1]} : vector<4x208xf32> to vector<4x16xf32>
    %388 = vector.extract_strided_slice %385 {offsets = [0, 0], sizes = [4, 1], strides = [1, 1]} : vector<4x4xf32> to vector<4x1xf32>
    %389 = vector.broadcast %388 : vector<4x1xf32> to vector<4x16xf32>
    %390 = vector.broadcast %85 : vector<1x16xf32> to vector<4x16xf32>
    %391 = arith.mulf %389, %390 : vector<4x16xf32>
    %392 = arith.addf %387, %391 : vector<4x16xf32>
    %393 = vector.extract_strided_slice %385 {offsets = [0, 1], sizes = [4, 1], strides = [1, 1]} : vector<4x4xf32> to vector<4x1xf32>
    %394 = vector.broadcast %393 : vector<4x1xf32> to vector<4x16xf32>
    %395 = vector.broadcast %86 : vector<1x16xf32> to vector<4x16xf32>
    %396 = arith.mulf %394, %395 : vector<4x16xf32>
    %397 = arith.addf %392, %396 : vector<4x16xf32>
    %398 = vector.extract_strided_slice %385 {offsets = [0, 2], sizes = [4, 1], strides = [1, 1]} : vector<4x4xf32> to vector<4x1xf32>
    %399 = vector.broadcast %398 : vector<4x1xf32> to vector<4x16xf32>
    %400 = vector.broadcast %87 : vector<1x16xf32> to vector<4x16xf32>
    %401 = arith.mulf %399, %400 : vector<4x16xf32>
    %402 = arith.addf %397, %401 : vector<4x16xf32>
    %403 = vector.extract_strided_slice %385 {offsets = [0, 3], sizes = [4, 1], strides = [1, 1]} : vector<4x4xf32> to vector<4x1xf32>
    %404 = vector.broadcast %403 : vector<4x1xf32> to vector<4x16xf32>
    %405 = vector.broadcast %88 : vector<1x16xf32> to vector<4x16xf32>
    %406 = arith.mulf %404, %405 : vector<4x16xf32>
    %407 = arith.addf %402, %406 : vector<4x16xf32>
    %408 = arith.negf %407 : vector<4x16xf32>
    %409 = math.exp %408 : vector<4x16xf32>
    %cst_73 = arith.constant 1.000000e+00 : f32
    %410 = vector.broadcast %cst_73 : f32 to vector<4x16xf32>
    %411 = arith.addf %410, %409 : vector<4x16xf32>
    %412 = arith.divf %410, %411 : vector<4x16xf32>
    %413 = vector.extract_strided_slice %407 {offsets = [0, 8], sizes = [4, 4], strides = [1, 1]} : vector<4x16xf32> to vector<4x4xf32>
    %414 = math.tanh %413 : vector<4x4xf32>
    %415 = vector.extract_strided_slice %412 {offsets = [0, 4], sizes = [4, 4], strides = [1, 1]} : vector<4x16xf32> to vector<4x4xf32>
    %416 = arith.mulf %415, %382 : vector<4x4xf32>
    %417 = vector.extract_strided_slice %412 {offsets = [0, 0], sizes = [4, 4], strides = [1, 1]} : vector<4x16xf32> to vector<4x4xf32>
    %418 = arith.mulf %417, %414 : vector<4x4xf32>
    %419 = arith.addf %416, %418 : vector<4x4xf32>
    %420 = vector.extract_strided_slice %412 {offsets = [0, 12], sizes = [4, 4], strides = [1, 1]} : vector<4x16xf32> to vector<4x4xf32>
    %421 = math.tanh %419 : vector<4x4xf32>
    %422 = arith.mulf %420, %421 : vector<4x4xf32>
    %c0_74 = arith.constant 0 : index
    %c32_75 = arith.constant 32 : index
    %423 = vector.load %arg16[%c0_74, %c32_75] : memref<4x52xf32, #tpu.memory_space<vmem>>, vector<4x4xf32>
    tpu.vector_store %arg16[%c0_74, %c32_75], %422 {strides = array<i32>} : memref<4x52xf32, #tpu.memory_space<vmem>>, vector<4x4xf32>,
    %424 = vector.extract_strided_slice %83 {offsets = [0, 144], sizes = [4, 16], strides = [1, 1]} : vector<4x208xf32> to vector<4x16xf32>
    %425 = vector.extract_strided_slice %422 {offsets = [0, 0], sizes = [4, 1], strides = [1, 1]} : vector<4x4xf32> to vector<4x1xf32>
    %426 = vector.broadcast %425 : vector<4x1xf32> to vector<4x16xf32>
    %427 = vector.broadcast %85 : vector<1x16xf32> to vector<4x16xf32>
    %428 = arith.mulf %426, %427 : vector<4x16xf32>
    %429 = arith.addf %424, %428 : vector<4x16xf32>
    %430 = vector.extract_strided_slice %422 {offsets = [0, 1], sizes = [4, 1], strides = [1, 1]} : vector<4x4xf32> to vector<4x1xf32>
    %431 = vector.broadcast %430 : vector<4x1xf32> to vector<4x16xf32>
    %432 = vector.broadcast %86 : vector<1x16xf32> to vector<4x16xf32>
    %433 = arith.mulf %431, %432 : vector<4x16xf32>
    %434 = arith.addf %429, %433 : vector<4x16xf32>
    %435 = vector.extract_strided_slice %422 {offsets = [0, 2], sizes = [4, 1], strides = [1, 1]} : vector<4x4xf32> to vector<4x1xf32>
    %436 = vector.broadcast %435 : vector<4x1xf32> to vector<4x16xf32>
    %437 = vector.broadcast %87 : vector<1x16xf32> to vector<4x16xf32>
    %438 = arith.mulf %436, %437 : vector<4x16xf32>
    %439 = arith.addf %434, %438 : vector<4x16xf32>
    %440 = vector.extract_strided_slice %422 {offsets = [0, 3], sizes = [4, 1], strides = [1, 1]} : vector<4x4xf32> to vector<4x1xf32>
    %441 = vector.broadcast %440 : vector<4x1xf32> to vector<4x16xf32>
    %442 = vector.broadcast %88 : vector<1x16xf32> to vector<4x16xf32>
    %443 = arith.mulf %441, %442 : vector<4x16xf32>
    %444 = arith.addf %439, %443 : vector<4x16xf32>
    %445 = arith.negf %444 : vector<4x16xf32>
    %446 = math.exp %445 : vector<4x16xf32>
    %cst_76 = arith.constant 1.000000e+00 : f32
    %447 = vector.broadcast %cst_76 : f32 to vector<4x16xf32>
    %448 = arith.addf %447, %446 : vector<4x16xf32>
    %449 = arith.divf %447, %448 : vector<4x16xf32>
    %450 = vector.extract_strided_slice %444 {offsets = [0, 8], sizes = [4, 4], strides = [1, 1]} : vector<4x16xf32> to vector<4x4xf32>
    %451 = math.tanh %450 : vector<4x4xf32>
    %452 = vector.extract_strided_slice %449 {offsets = [0, 4], sizes = [4, 4], strides = [1, 1]} : vector<4x16xf32> to vector<4x4xf32>
    %453 = arith.mulf %452, %419 : vector<4x4xf32>
    %454 = vector.extract_strided_slice %449 {offsets = [0, 0], sizes = [4, 4], strides = [1, 1]} : vector<4x16xf32> to vector<4x4xf32>
    %455 = arith.mulf %454, %451 : vector<4x4xf32>
    %456 = arith.addf %453, %455 : vector<4x4xf32>
    %457 = vector.extract_strided_slice %449 {offsets = [0, 12], sizes = [4, 4], strides = [1, 1]} : vector<4x16xf32> to vector<4x4xf32>
    %458 = math.tanh %456 : vector<4x4xf32>
    %459 = arith.mulf %457, %458 : vector<4x4xf32>
    %c0_77 = arith.constant 0 : index
    %c36_78 = arith.constant 36 : index
    %460 = vector.load %arg16[%c0_77, %c36_78] : memref<4x52xf32, #tpu.memory_space<vmem>>, vector<4x4xf32>
    tpu.vector_store %arg16[%c0_77, %c36_78], %459 {strides = array<i32>} : memref<4x52xf32, #tpu.memory_space<vmem>>, vector<4x4xf32>,
    %461 = vector.extract_strided_slice %83 {offsets = [0, 160], sizes = [4, 16], strides = [1, 1]} : vector<4x208xf32> to vector<4x16xf32>
    %462 = vector.extract_strided_slice %459 {offsets = [0, 0], sizes = [4, 1], strides = [1, 1]} : vector<4x4xf32> to vector<4x1xf32>
    %463 = vector.broadcast %462 : vector<4x1xf32> to vector<4x16xf32>
    %464 = vector.broadcast %85 : vector<1x16xf32> to vector<4x16xf32>
    %465 = arith.mulf %463, %464 : vector<4x16xf32>
    %466 = arith.addf %461, %465 : vector<4x16xf32>
    %467 = vector.extract_strided_slice %459 {offsets = [0, 1], sizes = [4, 1], strides = [1, 1]} : vector<4x4xf32> to vector<4x1xf32>
    %468 = vector.broadcast %467 : vector<4x1xf32> to vector<4x16xf32>
    %469 = vector.broadcast %86 : vector<1x16xf32> to vector<4x16xf32>
    %470 = arith.mulf %468, %469 : vector<4x16xf32>
    %471 = arith.addf %466, %470 : vector<4x16xf32>
    %472 = vector.extract_strided_slice %459 {offsets = [0, 2], sizes = [4, 1], strides = [1, 1]} : vector<4x4xf32> to vector<4x1xf32>
    %473 = vector.broadcast %472 : vector<4x1xf32> to vector<4x16xf32>
    %474 = vector.broadcast %87 : vector<1x16xf32> to vector<4x16xf32>
    %475 = arith.mulf %473, %474 : vector<4x16xf32>
    %476 = arith.addf %471, %475 : vector<4x16xf32>
    %477 = vector.extract_strided_slice %459 {offsets = [0, 3], sizes = [4, 1], strides = [1, 1]} : vector<4x4xf32> to vector<4x1xf32>
    %478 = vector.broadcast %477 : vector<4x1xf32> to vector<4x16xf32>
    %479 = vector.broadcast %88 : vector<1x16xf32> to vector<4x16xf32>
    %480 = arith.mulf %478, %479 : vector<4x16xf32>
    %481 = arith.addf %476, %480 : vector<4x16xf32>
    %482 = arith.negf %481 : vector<4x16xf32>
    %483 = math.exp %482 : vector<4x16xf32>
    %cst_79 = arith.constant 1.000000e+00 : f32
    %484 = vector.broadcast %cst_79 : f32 to vector<4x16xf32>
    %485 = arith.addf %484, %483 : vector<4x16xf32>
    %486 = arith.divf %484, %485 : vector<4x16xf32>
    %487 = vector.extract_strided_slice %481 {offsets = [0, 8], sizes = [4, 4], strides = [1, 1]} : vector<4x16xf32> to vector<4x4xf32>
    %488 = math.tanh %487 : vector<4x4xf32>
    %489 = vector.extract_strided_slice %486 {offsets = [0, 4], sizes = [4, 4], strides = [1, 1]} : vector<4x16xf32> to vector<4x4xf32>
    %490 = arith.mulf %489, %456 : vector<4x4xf32>
    %491 = vector.extract_strided_slice %486 {offsets = [0, 0], sizes = [4, 4], strides = [1, 1]} : vector<4x16xf32> to vector<4x4xf32>
    %492 = arith.mulf %491, %488 : vector<4x4xf32>
    %493 = arith.addf %490, %492 : vector<4x4xf32>
    %494 = vector.extract_strided_slice %486 {offsets = [0, 12], sizes = [4, 4], strides = [1, 1]} : vector<4x16xf32> to vector<4x4xf32>
    %495 = math.tanh %493 : vector<4x4xf32>
    %496 = arith.mulf %494, %495 : vector<4x4xf32>
    %c0_80 = arith.constant 0 : index
    %c40_81 = arith.constant 40 : index
    %497 = vector.load %arg16[%c0_80, %c40_81] : memref<4x52xf32, #tpu.memory_space<vmem>>, vector<4x4xf32>
    tpu.vector_store %arg16[%c0_80, %c40_81], %496 {strides = array<i32>} : memref<4x52xf32, #tpu.memory_space<vmem>>, vector<4x4xf32>,
    %498 = vector.extract_strided_slice %83 {offsets = [0, 176], sizes = [4, 16], strides = [1, 1]} : vector<4x208xf32> to vector<4x16xf32>
    %499 = vector.extract_strided_slice %496 {offsets = [0, 0], sizes = [4, 1], strides = [1, 1]} : vector<4x4xf32> to vector<4x1xf32>
    %500 = vector.broadcast %499 : vector<4x1xf32> to vector<4x16xf32>
    %501 = vector.broadcast %85 : vector<1x16xf32> to vector<4x16xf32>
    %502 = arith.mulf %500, %501 : vector<4x16xf32>
    %503 = arith.addf %498, %502 : vector<4x16xf32>
    %504 = vector.extract_strided_slice %496 {offsets = [0, 1], sizes = [4, 1], strides = [1, 1]} : vector<4x4xf32> to vector<4x1xf32>
    %505 = vector.broadcast %504 : vector<4x1xf32> to vector<4x16xf32>
    %506 = vector.broadcast %86 : vector<1x16xf32> to vector<4x16xf32>
    %507 = arith.mulf %505, %506 : vector<4x16xf32>
    %508 = arith.addf %503, %507 : vector<4x16xf32>
    %509 = vector.extract_strided_slice %496 {offsets = [0, 2], sizes = [4, 1], strides = [1, 1]} : vector<4x4xf32> to vector<4x1xf32>
    %510 = vector.broadcast %509 : vector<4x1xf32> to vector<4x16xf32>
    %511 = vector.broadcast %87 : vector<1x16xf32> to vector<4x16xf32>
    %512 = arith.mulf %510, %511 : vector<4x16xf32>
    %513 = arith.addf %508, %512 : vector<4x16xf32>
    %514 = vector.extract_strided_slice %496 {offsets = [0, 3], sizes = [4, 1], strides = [1, 1]} : vector<4x4xf32> to vector<4x1xf32>
    %515 = vector.broadcast %514 : vector<4x1xf32> to vector<4x16xf32>
    %516 = vector.broadcast %88 : vector<1x16xf32> to vector<4x16xf32>
    %517 = arith.mulf %515, %516 : vector<4x16xf32>
    %518 = arith.addf %513, %517 : vector<4x16xf32>
    %519 = arith.negf %518 : vector<4x16xf32>
    %520 = math.exp %519 : vector<4x16xf32>
    %cst_82 = arith.constant 1.000000e+00 : f32
    %521 = vector.broadcast %cst_82 : f32 to vector<4x16xf32>
    %522 = arith.addf %521, %520 : vector<4x16xf32>
    %523 = arith.divf %521, %522 : vector<4x16xf32>
    %524 = vector.extract_strided_slice %518 {offsets = [0, 8], sizes = [4, 4], strides = [1, 1]} : vector<4x16xf32> to vector<4x4xf32>
    %525 = math.tanh %524 : vector<4x4xf32>
    %526 = vector.extract_strided_slice %523 {offsets = [0, 4], sizes = [4, 4], strides = [1, 1]} : vector<4x16xf32> to vector<4x4xf32>
    %527 = arith.mulf %526, %493 : vector<4x4xf32>
    %528 = vector.extract_strided_slice %523 {offsets = [0, 0], sizes = [4, 4], strides = [1, 1]} : vector<4x16xf32> to vector<4x4xf32>
    %529 = arith.mulf %528, %525 : vector<4x4xf32>
    %530 = arith.addf %527, %529 : vector<4x4xf32>
    %531 = vector.extract_strided_slice %523 {offsets = [0, 12], sizes = [4, 4], strides = [1, 1]} : vector<4x16xf32> to vector<4x4xf32>
    %532 = math.tanh %530 : vector<4x4xf32>
    %533 = arith.mulf %531, %532 : vector<4x4xf32>
    %c0_83 = arith.constant 0 : index
    %c44_84 = arith.constant 44 : index
    %534 = vector.load %arg16[%c0_83, %c44_84] : memref<4x52xf32, #tpu.memory_space<vmem>>, vector<4x4xf32>
    tpu.vector_store %arg16[%c0_83, %c44_84], %533 {strides = array<i32>} : memref<4x52xf32, #tpu.memory_space<vmem>>, vector<4x4xf32>,
    %535 = vector.extract_strided_slice %83 {offsets = [0, 192], sizes = [4, 16], strides = [1, 1]} : vector<4x208xf32> to vector<4x16xf32>
    %536 = vector.extract_strided_slice %533 {offsets = [0, 0], sizes = [4, 1], strides = [1, 1]} : vector<4x4xf32> to vector<4x1xf32>
    %537 = vector.broadcast %536 : vector<4x1xf32> to vector<4x16xf32>
    %538 = vector.broadcast %85 : vector<1x16xf32> to vector<4x16xf32>
    %539 = arith.mulf %537, %538 : vector<4x16xf32>
    %540 = arith.addf %535, %539 : vector<4x16xf32>
    %541 = vector.extract_strided_slice %533 {offsets = [0, 1], sizes = [4, 1], strides = [1, 1]} : vector<4x4xf32> to vector<4x1xf32>
    %542 = vector.broadcast %541 : vector<4x1xf32> to vector<4x16xf32>
    %543 = vector.broadcast %86 : vector<1x16xf32> to vector<4x16xf32>
    %544 = arith.mulf %542, %543 : vector<4x16xf32>
    %545 = arith.addf %540, %544 : vector<4x16xf32>
    %546 = vector.extract_strided_slice %533 {offsets = [0, 2], sizes = [4, 1], strides = [1, 1]} : vector<4x4xf32> to vector<4x1xf32>
    %547 = vector.broadcast %546 : vector<4x1xf32> to vector<4x16xf32>
    %548 = vector.broadcast %87 : vector<1x16xf32> to vector<4x16xf32>
    %549 = arith.mulf %547, %548 : vector<4x16xf32>
    %550 = arith.addf %545, %549 : vector<4x16xf32>
    %551 = vector.extract_strided_slice %533 {offsets = [0, 3], sizes = [4, 1], strides = [1, 1]} : vector<4x4xf32> to vector<4x1xf32>
    %552 = vector.broadcast %551 : vector<4x1xf32> to vector<4x16xf32>
    %553 = vector.broadcast %88 : vector<1x16xf32> to vector<4x16xf32>
    %554 = arith.mulf %552, %553 : vector<4x16xf32>
    %555 = arith.addf %550, %554 : vector<4x16xf32>
    %556 = arith.negf %555 : vector<4x16xf32>
    %557 = math.exp %556 : vector<4x16xf32>
    %cst_85 = arith.constant 1.000000e+00 : f32
    %558 = vector.broadcast %cst_85 : f32 to vector<4x16xf32>
    %559 = arith.addf %558, %557 : vector<4x16xf32>
    %560 = arith.divf %558, %559 : vector<4x16xf32>
    %561 = vector.extract_strided_slice %555 {offsets = [0, 8], sizes = [4, 4], strides = [1, 1]} : vector<4x16xf32> to vector<4x4xf32>
    %562 = math.tanh %561 : vector<4x4xf32>
    %563 = vector.extract_strided_slice %560 {offsets = [0, 4], sizes = [4, 4], strides = [1, 1]} : vector<4x16xf32> to vector<4x4xf32>
    %564 = arith.mulf %563, %530 : vector<4x4xf32>
    %565 = vector.extract_strided_slice %560 {offsets = [0, 0], sizes = [4, 4], strides = [1, 1]} : vector<4x16xf32> to vector<4x4xf32>
    %566 = arith.mulf %565, %562 : vector<4x4xf32>
    %567 = arith.addf %564, %566 : vector<4x4xf32>
    %568 = vector.extract_strided_slice %560 {offsets = [0, 12], sizes = [4, 4], strides = [1, 1]} : vector<4x16xf32> to vector<4x4xf32>
    %569 = math.tanh %567 : vector<4x4xf32>
    %570 = arith.mulf %568, %569 : vector<4x4xf32>
    %c0_86 = arith.constant 0 : index
    %c48_87 = arith.constant 48 : index
    %571 = vector.load %arg16[%c0_86, %c48_87] : memref<4x52xf32, #tpu.memory_space<vmem>>, vector<4x4xf32>
    tpu.vector_store %arg16[%c0_86, %c48_87], %570 {strides = array<i32>} : memref<4x52xf32, #tpu.memory_space<vmem>>, vector<4x4xf32>,
    %c0_88 = arith.constant 0 : index
    %c0_89 = arith.constant 0 : index
    %572 = vector.load %arg16[%c0_88, %c0_89] : memref<4x52xf32, #tpu.memory_space<vmem>>, vector<4x52xf32>
    %c0_90 = arith.constant 0 : index
    %c0_91 = arith.constant 0 : index
    %573 = vector.load %arg8[%c0_90, %c0_91] : memref<1x52xf32, #tpu.memory_space<vmem>>, vector<1x52xf32>
    %574 = vector.broadcast %573 : vector<1x52xf32> to vector<4x52xf32>
    %575 = arith.mulf %572, %574 : vector<4x52xf32>
    %c0_92 = arith.constant 0 : index
    %c0_93 = arith.constant 0 : index
    %576 = vector.load %arg9[%c0_92, %c0_93] : memref<1x52xf32, #tpu.memory_space<vmem>>, vector<1x52xf32>
    %577 = vector.broadcast %576 : vector<1x52xf32> to vector<4x52xf32>
    %578 = arith.addf %575, %577 : vector<4x52xf32>
    %579 = arith.addf %578, %81 : vector<4x52xf32>
    %c0_94 = arith.constant 0 : index
    %c0_95 = arith.constant 0 : index
    %580 = vector.load %arg10[%c0_94, %c0_95] : memref<52x512xf32, #tpu.memory_space<vmem>>, vector<52x512xf32>
    %cst_96 = arith.constant dense<0.000000e+00> : vector<4x512xf32>
    %581 = tpu.matmul %579, %580, %cst_96 {dimension_numbers = #tpu.dot_dimension_numbers<[1], [0], [0], [1], [0, 0, 1, 1], [], []>} : vector<4x52xf32>, vector<52x512xf32>, vector<4x512xf32> -> vector<4x512xf32>
    %c0_97 = arith.constant 0 : index
    %c0_98 = arith.constant 0 : index
    %582 = vector.load %arg11[%c0_97, %c0_98] : memref<1x512xf32, #tpu.memory_space<vmem>>, vector<1x512xf32>
    %583 = vector.broadcast %582 : vector<1x512xf32> to vector<4x512xf32>
    %584 = arith.addf %581, %583 : vector<4x512xf32>
    %cst_99 = arith.constant 5.000000e-01 : f32
    %585 = vector.broadcast %cst_99 : f32 to vector<4x512xf32>
    %586 = arith.mulf %585, %584 : vector<4x512xf32>
    %cst_100 = arith.constant 0.707106769 : f32
    %587 = vector.broadcast %cst_100 : f32 to vector<4x512xf32>
    %588 = arith.mulf %584, %587 : vector<4x512xf32>
    %589 = math.absf %588 : vector<4x512xf32>
    %cst_101 = arith.constant 0.327591091 : f32
    %590 = vector.broadcast %cst_101 : f32 to vector<4x512xf32>
    %591 = arith.mulf %590, %589 : vector<4x512xf32>
    %cst_102 = arith.constant 1.000000e+00 : f32
    %592 = vector.broadcast %cst_102 : f32 to vector<4x512xf32>
    %593 = arith.addf %592, %591 : vector<4x512xf32>
    %cst_103 = arith.constant 1.000000e+00 : f32
    %594 = vector.broadcast %cst_103 : f32 to vector<4x512xf32>
    %595 = arith.divf %594, %593 : vector<4x512xf32>
    %cst_104 = arith.constant 1.06140542 : f32
    %596 = vector.broadcast %cst_104 : f32 to vector<4x512xf32>
    %597 = arith.mulf %596, %595 : vector<4x512xf32>
    %cst_105 = arith.constant -1.45315206 : f32
    %598 = vector.broadcast %cst_105 : f32 to vector<4x512xf32>
    %599 = arith.addf %597, %598 : vector<4x512xf32>
    %600 = arith.mulf %599, %595 : vector<4x512xf32>
    %cst_106 = arith.constant 1.42141378 : f32
    %601 = vector.broadcast %cst_106 : f32 to vector<4x512xf32>
    %602 = arith.addf %600, %601 : vector<4x512xf32>
    %603 = arith.mulf %602, %595 : vector<4x512xf32>
    %cst_107 = arith.constant -0.284496725 : f32
    %604 = vector.broadcast %cst_107 : f32 to vector<4x512xf32>
    %605 = arith.addf %603, %604 : vector<4x512xf32>
    %606 = arith.mulf %605, %595 : vector<4x512xf32>
    %cst_108 = arith.constant 0.254829586 : f32
    %607 = vector.broadcast %cst_108 : f32 to vector<4x512xf32>
    %608 = arith.addf %606, %607 : vector<4x512xf32>
    %609 = arith.mulf %608, %595 : vector<4x512xf32>
    %cst_109 = arith.constant 0.000000e+00 : f32
    %610 = vector.broadcast %cst_109 : f32 to vector<4x512xf32>
    %611 = arith.subf %610, %589 : vector<4x512xf32>
    %612 = arith.mulf %611, %589 : vector<4x512xf32>
    %613 = math.exp %612 : vector<4x512xf32>
    %614 = arith.mulf %609, %613 : vector<4x512xf32>
    %cst_110 = arith.constant 1.000000e+00 : f32
    %615 = vector.broadcast %cst_110 : f32 to vector<4x512xf32>
    %616 = arith.subf %615, %614 : vector<4x512xf32>
    %cst_111 = arith.constant 0.000000e+00 : f32
    %617 = vector.broadcast %cst_111 : f32 to vector<4x512xf32>
    %618 = arith.cmpf oge, %588, %617 : vector<4x512xf32>
    %cst_112 = arith.constant 0.000000e+00 : f32
    %619 = vector.broadcast %cst_112 : f32 to vector<4x512xf32>
    %620 = arith.subf %619, %616 : vector<4x512xf32>
    %621 = arith.select %618, %616, %620 : vector<4x512xi1>, vector<4x512xf32>
    %cst_113 = arith.constant 1.000000e+00 : f32
    %622 = vector.broadcast %cst_113 : f32 to vector<4x512xf32>
    %623 = arith.addf %622, %621 : vector<4x512xf32>
    %624 = arith.mulf %586, %623 : vector<4x512xf32>
    %c0_114 = arith.constant 0 : index
    %c0_115 = arith.constant 0 : index
    %625 = vector.load %arg12[%c0_114, %c0_115] : memref<512x8xf32, #tpu.memory_space<vmem>>, vector<512x8xf32>
    %cst_116 = arith.constant dense<0.000000e+00> : vector<4x8xf32>
    %626 = tpu.matmul %624, %625, %cst_116 {dimension_numbers = #tpu.dot_dimension_numbers<[1], [0], [0], [1], [0, 0, 1, 1], [], []>} : vector<4x512xf32>, vector<512x8xf32>, vector<4x8xf32> -> vector<4x8xf32>
    %c0_117 = arith.constant 0 : index
    %c0_118 = arith.constant 0 : index
    %627 = vector.load %arg13[%c0_117, %c0_118] : memref<1x8xf32, #tpu.memory_space<vmem>>, vector<1x8xf32>
    %628 = vector.broadcast %627 : vector<1x8xf32> to vector<4x8xf32>
    %629 = arith.addf %626, %628 : vector<4x8xf32>
    %c0_119 = arith.constant 0 : index
    %c0_120 = arith.constant 0 : index
    %630 = vector.load %arg14[%c0_119, %c0_120] : memref<4x8xf32, #tpu.memory_space<vmem>>, vector<4x8xf32>
    tpu.vector_store %arg14[%c0_119, %c0_120], %629 {strides = array<i32>} : memref<4x8xf32, #tpu.memory_space<vmem>>, vector<4x8xf32>,
    return
  }
}

</mosaic_0001>

<llo_original>
// kernel: tile.8
$region0: #{tile.8}
  #allocation0 [shape = 's32[1]{0}', space=sflag, size = 0x4, scoped, tag = 'scoped memory for tile.8']
  %s0 = inlined_call_operand.vmem [shape: f32[4], index: 0, kind: input, shape index: {}]
  %s1 = inlined_call_operand.vmem [shape: f32[13,4], index: 1, kind: output, shape index: {}]
  // Predicated region
  $region2: #{tile.8} parent=0 // pred_check
    _
  $region3: #{tile.8} parent=0 // pred_check_branch
    %3 = sbr.rel (0) target = $region5
  $region4: #{tile.8} parent=0 // pred_region
    _
  $region5: #{tile.8} parent=0 // pred_fallthru
    _
  %v4 = vld [vmem:[%s0] ss:$0 sm:$0xff]
  %5 = vst [vmem:[%s1] sm:$0xff] %v4
  %s6 = scalar_lea.vmem %s1, 8
  %7 = vst [vmem:[%s6] sm:$0xff] %v4

// kernel: patch_rnn_forward.1
$region0: #{patch_rnn_forward.1}
  #allocation0 [shape = 'u32[]', space=smem, size = 0x4, offset = 0x4, fixed_abs, tag = 'smem constant byte address 0x4 - core index']
  #allocation1 [shape = 'u32[72,128]{1,0:T(1,128)}', space=vmem, size = 0x9000, scoped, tag = 'internal scratch']
  #allocation2 [shape = 'f32[4,52]{1,0:T(4,128)}', space=vmem, size = 0x800, scoped, tag = 'scratch operand']
  #allocation3 [shape = 'f32[4,52]{1,0:T(4,128)}', space=vmem, size = 0x800, scoped, tag = 'scratch operand']
  %s0 = inlined_call_operand.vmem [shape: f32[4,16], index: 0, kind: input, shape index: {}]
  %s1 = inlined_call_operand.vmem [shape: f32[1,52], index: 1, kind: input, shape index: {}]
  %s2 = inlined_call_operand.vmem [shape: f32[52,52], index: 2, kind: input, shape index: {}]
  %s3 = inlined_call_operand.vmem [shape: f32[1,52], index: 3, kind: input, shape index: {}]
  %s4 = inlined_call_operand.vmem [shape: f32[1,52], index: 4, kind: input, shape index: {}]
  %s5 = inlined_call_operand.vmem [shape: f32[1,52], index: 5, kind: input, shape index: {}]
  %s6 = inlined_call_operand.vmem [shape: f32[52,208], index: 6, kind: input, shape index: {}]
  %s7 = inlined_call_operand.vmem [shape: f32[4,16], index: 7, kind: input, shape index: {}]
  %s8 = inlined_call_operand.vmem [shape: f32[1,52], index: 8, kind: input, shape index: {}]
  %s9 = inlined_call_operand.vmem [shape: f32[1,52], index: 9, kind: input, shape index: {}]
  %s10 = inlined_call_operand.vmem [shape: f32[52,512], index: 10, kind: input, shape index: {}]
  %s11 = inlined_call_operand.vmem [shape: f32[1,512], index: 11, kind: input, shape index: {}]
  %s12 = inlined_call_operand.vmem [shape: f32[512,8], index: 12, kind: input, shape index: {}]
  %s13 = inlined_call_operand.vmem [shape: f32[1,8], index: 13, kind: input, shape index: {}]
  %s14 = inlined_call_operand.hbm [shape: f32[4,8], index: 14, kind: output, shape index: {}]
  %s15 = sld [smem:[#allocation0]]
  $region66: #{patch_rnn_forward.1} parent=0
    _
  %s17 = ssub.s32 1, %s15
  %s18 = scalar_select 0, %s17, %s15
  $region1: #{patch_rnn_forward.1} parent=0
    #allocation4 [shape = 'u8[2048]{0}', space=vmem, size = 0x800, scoped, tag = 'output window, operand 0, single buffered']
    #allocation5 [shape = 's32[1]{0}', space=sflag, size = 0x4, scoped, tag = 'scoped memory for patch_rnn_forward.1']
    %19 = vsyncpa [#allocation5], 0
    // Predicated region
    $region2: #{patch_rnn_forward.1} parent=1 // pred_check
      _
    $region3: #{patch_rnn_forward.1} parent=1 // pred_check_branch
      %21 = sbr.rel (0) target = $region5
    $region4: #{patch_rnn_forward.1} parent=1 // pred_region
      _
    $region5: #{patch_rnn_forward.1} parent=1 // pred_fallthru
      _
    // Predicated region
    $region6: #{patch_rnn_forward.1} parent=1 // pred_check
      _
    $region7: #{patch_rnn_forward.1} parent=1 // pred_check_branch
      %23 = sbr.rel (0) target = $region9
    $region8: #{patch_rnn_forward.1} parent=1 // pred_region
      _
    $region9: #{patch_rnn_forward.1} parent=1 // pred_fallthru
      _
    // Predicated region
    $region10: #{patch_rnn_forward.1} parent=1 // pred_check
      _
    $region11: #{patch_rnn_forward.1} parent=1 // pred_check_branch
      %25 = sbr.rel (0) target = $region13
    $region12: #{patch_rnn_forward.1} parent=1 // pred_region
      _
    $region13: #{patch_rnn_forward.1} parent=1 // pred_fallthru
      _
    // Predicated region
    $region14: #{patch_rnn_forward.1} parent=1 // pred_check
      _
    $region15: #{patch_rnn_forward.1} parent=1 // pred_check_branch
      %27 = sbr.rel (0) target = $region17
    $region16: #{patch_rnn_forward.1} parent=1 // pred_region
      _
    $region17: #{patch_rnn_forward.1} parent=1 // pred_fallthru
      _
    // Predicated region
    $region18: #{patch_rnn_forward.1} parent=1 // pred_check
      _
    $region19: #{patch_rnn_forward.1} parent=1 // pred_check_branch
      %29 = sbr.rel (0) target = $region21
    $region20: #{patch_rnn_forward.1} parent=1 // pred_region
      _
    $region21: #{patch_rnn_forward.1} parent=1 // pred_fallthru
      _
    // Predicated region
    $region22: #{patch_rnn_forward.1} parent=1 // pred_check
      _
    $region23: #{patch_rnn_forward.1} parent=1 // pred_check_branch
      %31 = sbr.rel (0) target = $region25
    $region24: #{patch_rnn_forward.1} parent=1 // pred_region
      _
    $region25: #{patch_rnn_forward.1} parent=1 // pred_fallthru
      _
    // Predicated region
    $region26: #{patch_rnn_forward.1} parent=1 // pred_check
      _
    $region27: #{patch_rnn_forward.1} parent=1 // pred_check_branch
      %33 = sbr.rel (0) target = $region29
    $region28: #{patch_rnn_forward.1} parent=1 // pred_region
      _
    $region29: #{patch_rnn_forward.1} parent=1 // pred_fallthru
      _
    // Predicated region
    $region30: #{patch_rnn_forward.1} parent=1 // pred_check
      _
    $region31: #{patch_rnn_forward.1} parent=1 // pred_check_branch
      %35 = sbr.rel (0) target = $region33
    $region32: #{patch_rnn_forward.1} parent=1 // pred_region
      _
    $region33: #{patch_rnn_forward.1} parent=1 // pred_fallthru
      _
    // Predicated region
    $region34: #{patch_rnn_forward.1} parent=1 // pred_check
      _
    $region35: #{patch_rnn_forward.1} parent=1 // pred_check_branch
      %37 = sbr.rel (0) target = $region37
    $region36: #{patch_rnn_forward.1} parent=1 // pred_region
      _
    $region37: #{patch_rnn_forward.1} parent=1 // pred_fallthru
      _
    // Predicated region
    $region38: #{patch_rnn_forward.1} parent=1 // pred_check
      _
    $region39: #{patch_rnn_forward.1} parent=1 // pred_check_branch
      %39 = sbr.rel (0) target = $region41
    $region40: #{patch_rnn_forward.1} parent=1 // pred_region
      _
    $region41: #{patch_rnn_forward.1} parent=1 // pred_fallthru
      _
    // Predicated region
    $region42: #{patch_rnn_forward.1} parent=1 // pred_check
      _
    $region43: #{patch_rnn_forward.1} parent=1 // pred_check_branch
      %41 = sbr.rel (0) target = $region45
    $region44: #{patch_rnn_forward.1} parent=1 // pred_region
      _
    $region45: #{patch_rnn_forward.1} parent=1 // pred_fallthru
      _
    // Predicated region
    $region46: #{patch_rnn_forward.1} parent=1 // pred_check
      _
    $region47: #{patch_rnn_forward.1} parent=1 // pred_check_branch
      %43 = sbr.rel (0) target = $region49
    $region48: #{patch_rnn_forward.1} parent=1 // pred_region
      _
    $region49: #{patch_rnn_forward.1} parent=1 // pred_fallthru
      _
    // Predicated region
    $region50: #{patch_rnn_forward.1} parent=1 // pred_check
      _
    $region51: #{patch_rnn_forward.1} parent=1 // pred_check_branch
      %45 = sbr.rel (0) target = $region53
    $region52: #{patch_rnn_forward.1} parent=1 // pred_region
      _
    $region53: #{patch_rnn_forward.1} parent=1 // pred_fallthru
      _
    // Predicated region
    $region54: #{patch_rnn_forward.1} parent=1 // pred_check
      _
    $region55: #{patch_rnn_forward.1} parent=1 // pred_check_branch
      %47 = sbr.rel (0) target = $region57
    $region56: #{patch_rnn_forward.1} parent=1 // pred_region
      _
    $region57: #{patch_rnn_forward.1} parent=1 // pred_fallthru
      _
    %v48 = vld [vmem:[%s0] sm:$0xf]
    %vm49 = vcmask 27648
    %50 = vst.msk [vmem:[#allocation2] sm:$0xf] %vm49, %v48
    %52 = vrot.lane.b32.xlu0 %v48, 3
    %v53 = vpop.permute.xlu0 %52
    %vm55 = vcmask 60448
    %56 = vst.msk [vmem:[#allocation2] sm:$0xf] %vm55, %v53
    %57 = vrot.lane.b32.xlu0 %v48, 6
    %v58 = vpop.permute.xlu0 %57
    %vm60 = vcmask 93248
    %61 = vst.msk [vmem:[#allocation2] sm:$0xf] %vm60, %v58
    %62 = vrot.lane.b32.xlu0 %v48, 9
    %v63 = vpop.permute.xlu0 %62
    %vm65 = vcmask 126048
    %66 = vst.msk [vmem:[#allocation2] sm:$0xf] %vm65, %v63
    %67 = vrot.lane.b32.xlu0 %v48, 12
    %v68 = vpop.permute.xlu0 %67
    %vm70 = vcmask 158848
    %71 = vst.msk [vmem:[#allocation2] sm:$0xf] %vm70, %v68
    %72 = vrot.lane.b32.xlu0 %v48, 15
    %v73 = vpop.permute.xlu0 %72
    %vm75 = vcmask 191648
    %76 = vst.msk [vmem:[#allocation2] sm:$0xf] %vm75, %v73
    %77 = vrot.lane.b32.xlu0 %v48, 18
    %v78 = vpop.permute.xlu0 %77
    %vm80 = vcmask 224448
    %81 = vst.msk [vmem:[#allocation2] sm:$0xf] %vm80, %v78
    %82 = vrot.lane.b32.xlu0 %v48, 21
    %v83 = vpop.permute.xlu0 %82
    %vm85 = vcmask 257248
    %86 = vst.msk [vmem:[#allocation2] sm:$0xf] %vm85, %v83
    %87 = vrot.lane.b32.xlu0 %v48, 24
    %v88 = vpop.permute.xlu0 %87
    %vm90 = vcmask 290048
    %91 = vst.msk [vmem:[#allocation2] sm:$0xf] %vm90, %v88
    %92 = vrot.lane.b32.xlu0 %v48, 27
    %v93 = vpop.permute.xlu0 %92
    %vm95 = vcmask 322848
    %96 = vst.msk [vmem:[#allocation2] sm:$0xf] %vm95, %v93
    %97 = vrot.lane.b32.xlu0 %v48, 30
    %v98 = vpop.permute.xlu0 %97
    %vm100 = vcmask 355648
    %101 = vst.msk [vmem:[#allocation2] sm:$0xf] %vm100, %v98
    %102 = vrot.lane.b32.xlu0 %v48, 33
    %v103 = vpop.permute.xlu0 %102
    %vm105 = vcmask 388448
    %106 = vst.msk [vmem:[#allocation2] sm:$0xf] %vm105, %v103
    %107 = vrot.lane.b32.xlu0 %v48, 36
    %v108 = vpop.permute.xlu0 %107
    %vm110 = vcmask 421248
    %111 = vst.msk [vmem:[#allocation2] sm:$0xf] %vm110, %v108
    %v112 = vld [vmem:[#allocation2] sm:$0xf]
    %v113 = vld [vmem:[%s1] sm:$0x1]
    %v115 = vperm.slane %v113, 0
    %v117 = vadd.f32 %v112, %v115
    %v118 = vld [vmem:[%s2] sm:$0xff]
    %v119 = vld [vmem:[%s2 + $0x8] sm:$0xff]
    %v120 = vld [vmem:[%s2 + $0x10] sm:$0xff]
    %v121 = vld [vmem:[%s2 + $0x18] sm:$0xff]
    %v122 = vld [vmem:[%s2 + $0x20] sm:$0xff]
    %v123 = vld [vmem:[%s2 + $0x28] sm:$0xff]
    %v124 = vld [vmem:[%s2 + $0x30] sm:$0xf]
    %v125 = vld [vmem:[%s3] sm:$0x1]
    %v127 = vperm.slane %v125, 0
    %vm129 = vcmask 424960
    %v131 = vsel %vm129, %v117, 0
    %vm133 = vcmask 1043456
    %v135 = vsel %vm133, %v124, 0
    %137 = vmatpush.msra.mxu0 0.0
    %138 = vmatpush.msra.mxu0 0.0
    %139 = vmatpush.msra.mxu0 0.0
    %140 = vmatpush.msra.mxu0 0.0
    %141 = vmatpush.msra.mxu0 0.0
    %142 = vmatpush.msra.mxu0 0.0
    %143 = vmatpush.msra.mxu0 0.0
    %144 = vmatpush.msra.mxu0 0.0
    %145 = vmatpush.msra.mxu0 0.0
    %146 = vmatpush.msra.mxu0 %v135
    %147 = vmatpush.msra.mxu0 %v123
    %148 = vmatpush.msra.mxu0 %v122
    %149 = vmatpush.msra.mxu0 %v121
    %150 = vmatpush.msra.mxu0 %v120
    %151 = vmatpush.msra.mxu0 %v119
    %152 = vmatpush.msra.mxu0 %v118
    %153 = vmatmul.f32.gmra.mxu0 %v131
    %v154 = vpop.f32.mrf.mxu0
    %v155 = vadd.f32 %v127, %v154
    %156 = vdwg.mxu0
    %v157 = vmul.f32 %v155, 0.5
    %v158 = vmul.f32 %v155, 0.70710677
    %v159 = vand.u32 2147483647, %v158
    %v160 = vmul.f32 %v159, 0.3275911
    %v161 = vadd.f32 %v160, 1.0
    %v162 = vrcp.pop %v161
    %v163 = vmul.f32 %v161, %v162
    %v164 = vsub.f32 1.0, %v163
    %v165 = vmul.f32 %v162, %v164
    %v166 = vadd.f32 %v162, %v165
    %vm167 = vweird.f32 %v161
    %vm168 = vweird.f32 %v162
    %vm169 = vmor %vm167, %vm168
    %v170 = vsel %vm169, %v162, %v166
    %v171 = vand.u32 2147483647, %v161
    %vm172 = vcmp.eq.f32.partialorder %v171, 8.507059e+37
    %v173 = vand.u32 %v161, 2147483648
    %v174 = vor.u32 1.1754944e-38, %v173
    %v175 = vsel %vm172, %v174, %v170
    %v176 = vmul.f32 1.0, %v175
    %v177 = vmul.f32 %v176, 1.0614054
    %v178 = vadd.f32 %v177, -1.4531521
    %v179 = vmul.f32 %v178, %v176
    %v180 = vadd.f32 %v179, 1.4214138
    %v181 = vmul.f32 %v180, %v176
    %v182 = vadd.f32 %v181, -0.28449672
    %v183 = vmul.f32 %v182, %v176
    %v184 = vadd.f32 %v183, 0.2548296
    %v185 = vmul.f32 %v184, %v176
    %v186 = vsub.f32 0.0, %v159
    %v187 = vmul.f32 %v186, %v159
    %v188 = vmul.f32 %v187, 1.442695
    %v189 = vpow.pop %v188
    %v190 = vmul.f32 %v185, %v189
    %v191 = vsub.f32 1.0, %v190
    %vm192 = vcmp.ge.f32.partialorder %v158, 0.0
    %v193 = vsub.f32 0.0, %v191
    %v194 = vsel %vm192, %v191, %v193
    %v195 = vadd.f32 %v194, 1.0
    %v196 = vmul.f32 %v157, %v195
    %v197 = vld [vmem:[%s4] sm:$0x1]
    %v199 = vperm.slane %v197, 0
    %v201 = vmul.f32 %v196, %v199
    %v202 = vld [vmem:[%s5] sm:$0x1]
    %v204 = vperm.slane %v202, 0
    %v206 = vadd.f32 %v201, %v204
    %v207 = vld [vmem:[%s6] sm:$0xff]
    %v208 = vld [vmem:[%s6 + $0x8] sm:$0xff]
    %v209 = vld [vmem:[%s6 + $0x10] sm:$0xff]
    %v210 = vld [vmem:[%s6 + $0x18] sm:$0xff]
    %v211 = vld [vmem:[%s6 + $0x20] sm:$0xff]
    %v212 = vld [vmem:[%s6 + $0x28] sm:$0xff]
    %v213 = vld [vmem:[%s6 + $0x30] sm:$0xff]
    %v214 = vld [vmem:[%s6 + $0x38] sm:$0xff]
    %v215 = vld [vmem:[%s6 + $0x40] sm:$0xff]
    %v216 = vld [vmem:[%s6 + $0x48] sm:$0xff]
    %v217 = vld [vmem:[%s6 + $0x50] sm:$0xff]
    %v218 = vld [vmem:[%s6 + $0x58] sm:$0xff]
    %v219 = vld [vmem:[%s6 + $0x60] sm:$0xf]
    %v220 = vld [vmem:[%s6 + $0x68] sm:$0xf]
    %v222 = vsel %vm129, %v206, 0
    %v225 = vsel %vm133, %v219, 0
    %v228 = vsel %vm133, %v220, 0
    %230 = vmatpush.msra.mxu0 0.0
    %231 = vmatpush.msra.mxu0 0.0
    %232 = vmatpush.msra.mxu0 0.0
    %233 = vmatpush.msra.mxu0 0.0
    %234 = vmatpush.msra.mxu0 0.0
    %235 = vmatpush.msra.mxu0 0.0
    %236 = vmatpush.msra.mxu0 0.0
    %237 = vmatpush.msra.mxu0 0.0
    %238 = vmatpush.msra.mxu0 0.0
    %239 = vmatpush.msra.mxu0 %v225
    %240 = vmatpush.msra.mxu0 %v217
    %241 = vmatpush.msra.mxu0 %v215
    %242 = vmatpush.msra.mxu0 %v213
    %243 = vmatpush.msra.mxu0 %v211
    %244 = vmatpush.msra.mxu0 %v209
    %245 = vmatpush.msra.mxu0 %v207
    %246 = vmatmul.f32.gmra.mxu0 %v222
    %v247 = vpop.f32.mrf.mxu0
    %v248 = vadd.f32 0.0, %v247
    %249 = vdwg.mxu0
    %250 = vmatpush.msra.mxu0 0.0
    %251 = vmatpush.msra.mxu0 0.0
    %252 = vmatpush.msra.mxu0 0.0
    %253 = vmatpush.msra.mxu0 0.0
    %254 = vmatpush.msra.mxu0 0.0
    %255 = vmatpush.msra.mxu0 0.0
    %256 = vmatpush.msra.mxu0 0.0
    %257 = vmatpush.msra.mxu0 0.0
    %258 = vmatpush.msra.mxu0 0.0
    %259 = vmatpush.msra.mxu0 %v228
    %260 = vmatpush.msra.mxu0 %v218
    %261 = vmatpush.msra.mxu0 %v216
    %262 = vmatpush.msra.mxu0 %v214
    %263 = vmatpush.msra.mxu0 %v212
    %264 = vmatpush.msra.mxu0 %v210
    %265 = vmatpush.msra.mxu0 %v208
    %266 = vmatmul.f32.gmra.mxu0 %v222
    %v267 = vpop.f32.mrf.mxu0
    %v268 = vadd.f32 0.0, %v267
    %269 = vdwg.mxu0
    %v270 = vld [vmem:[%s7] sm:$0xf]
    %v271 = vperm.slane %v270, 0
    %v272 = vmul.f32 %v271, 0.0
    %v273 = vadd.f32 %v248, %v272
    %v274 = vperm.slane %v270, 1
    %v275 = vmul.f32 %v274, 0.0
    %v276 = vadd.f32 %v273, %v275
    %v277 = vperm.slane %v270, 2
    %v278 = vmul.f32 %v277, 0.0
    %v279 = vadd.f32 %v276, %v278
    %v280 = vperm.slane %v270, 3
    %v281 = vmul.f32 %v280, 0.0
    %v282 = vadd.f32 %v279, %v281
    %v283 = vxor.u32 %v282, 2147483648
    %v284 = vmul.f32 %v283, 1.442695
    %v285 = vpow.pop %v284
    %v286 = vadd.f32 %v285, 1.0
    %v287 = vrcp.pop %v286
    %v288 = vmul.f32 %v286, %v287
    %v289 = vsub.f32 1.0, %v288
    %v290 = vmul.f32 %v287, %v289
    %v291 = vadd.f32 %v287, %v290
    %vm292 = vweird.f32 %v286
    %vm293 = vweird.f32 %v287
    %vm294 = vmor %vm292, %vm293
    %v295 = vsel %vm294, %v287, %v291
    %v296 = vand.u32 2147483647, %v286
    %vm297 = vcmp.eq.f32.partialorder %v296, 8.507059e+37
    %v298 = vand.u32 %v286, 2147483648
    %v299 = vor.u32 1.1754944e-38, %v298
    %v300 = vsel %vm297, %v299, %v295
    %v301 = vmul.f32 1.0, %v300
    %v302 = vtanh.pop %v282
    %v303 = vmul.f32 %v301, 0.0
    %305 = vrot.lane.b32.xlu0 %v302, 120
    %v306 = vpop.permute.xlu0 %305
    %v308 = vmul.f32 %v301, %v306
    %310 = vrot.lane.b32.xlu0 %v308, 4
    %v311 = vpop.permute.xlu0 %310
    %v313 = vadd.f32 %v303, %v311
    %v314 = vtanh.pop %v313
    %316 = vrot.lane.b32.xlu0 %v314, 8
    %v317 = vpop.permute.xlu0 %316
    %v319 = vmul.f32 %v301, %v317
    %321 = vrot.lane.b32.xlu0 %v319, 116
    %v322 = vpop.permute.xlu0 %321
    %324 = vst.msk [vmem:[#allocation3] sm:$0xf] %vm49, %v322
    %325 = vset.pattern.permute.xlu0 12
    %326 = vperm.xlu0 %325, %v319
    %v327 = vpop.permute.xlu0 %326
    %v329 = vmul.f32 %v327, %v271
    %331 = vrot.lane.b32.xlu0 %v329, 16
    %v332 = vpop.permute.xlu0 %331
    %v334 = vadd.f32 %v248, %v332
    %335 = vset.pattern.permute.xlu0 13
    %336 = vperm.xlu0 %335, %v319
    %v337 = vpop.permute.xlu0 %336
    %v339 = vmul.f32 %v337, %v274
    %341 = vrot.lane.b32.xlu0 %v339, 16
    %v342 = vpop.permute.xlu0 %341
    %v344 = vadd.f32 %v334, %v342
    %345 = vset.pattern.permute.xlu0 14
    %346 = vperm.xlu0 %345, %v319
    %v347 = vpop.permute.xlu0 %346
    %v349 = vmul.f32 %v347, %v277
    %351 = vrot.lane.b32.xlu0 %v349, 16
    %v352 = vpop.permute.xlu0 %351
    %v354 = vadd.f32 %v344, %v352
    %355 = vset.pattern.permute.xlu0 15
    %356 = vperm.xlu0 %355, %v319
    %v357 = vpop.permute.xlu0 %356
    %v359 = vmul.f32 %v357, %v280
    %361 = vrot.lane.b32.xlu0 %v359, 16
    %v362 = vpop.permute.xlu0 %361
    %v364 = vadd.f32 %v354, %v362
    %v365 = vxor.u32 %v364, 2147483648
    %v366 = vmul.f32 %v365, 1.442695
    %v367 = vpow.pop %v366
    %v368 = vadd.f32 %v367, 1.0
    %v369 = vrcp.pop %v368
    %v370 = vmul.f32 %v368, %v369
    %v371 = vsub.f32 1.0, %v370
    %v372 = vmul.f32 %v369, %v371
    %v373 = vadd.f32 %v369, %v372
    %vm374 = vweird.f32 %v368
    %vm375 = vweird.f32 %v369
    %vm376 = vmor %vm374, %vm375
    %v377 = vsel %vm376, %v369, %v373
    %v378 = vand.u32 2147483647, %v368
    %vm379 = vcmp.eq.f32.partialorder %v378, 8.507059e+37
    %v380 = vand.u32 %v368, 2147483648
    %v381 = vor.u32 1.1754944e-38, %v380
    %v382 = vsel %vm379, %v381, %v377
    %v383 = vmul.f32 1.0, %v382
    %v384 = vtanh.pop %v364
    %386 = vrot.lane.b32.xlu0 %v313, 16
    %v387 = vpop.permute.xlu0 %386
    %v389 = vmul.f32 %v383, %v387
    %391 = vrot.lane.b32.xlu0 %v384, 120
    %v392 = vpop.permute.xlu0 %391
    %v394 = vmul.f32 %v383, %v392
    %396 = vrot.lane.b32.xlu0 %v394, 4
    %v397 = vpop.permute.xlu0 %396
    %v399 = vadd.f32 %v389, %v397
    %v400 = vtanh.pop %v399
    %402 = vrot.lane.b32.xlu0 %v400, 8
    %v403 = vpop.permute.xlu0 %402
    %v405 = vmul.f32 %v383, %v403
    %407 = vrot.lane.b32.xlu0 %v405, 104
    %v408 = vpop.permute.xlu0 %407
    %410 = vst.msk [vmem:[#allocation3] sm:$0xf] %vm55, %v408
    %411 = vset.pattern.permute.xlu0 28
    %412 = vperm.xlu0 %411, %v405
    %v413 = vpop.permute.xlu0 %412
    %v415 = vmul.f32 %v413, %v271
    %417 = vrot.lane.b32.xlu0 %v415, 32
    %v418 = vpop.permute.xlu0 %417
    %v420 = vadd.f32 %v248, %v418
    %421 = vset.pattern.permute.xlu0 29
    %422 = vperm.xlu0 %421, %v405
    %v423 = vpop.permute.xlu0 %422
    %v425 = vmul.f32 %v423, %v274
    %427 = vrot.lane.b32.xlu0 %v425, 32
    %v428 = vpop.permute.xlu0 %427
    %v430 = vadd.f32 %v420, %v428
    %431 = vset.pattern.permute.xlu0 30
    %432 = vperm.xlu0 %431, %v405
    %v433 = vpop.permute.xlu0 %432
    %v435 = vmul.f32 %v433, %v277
    %437 = vrot.lane.b32.xlu0 %v435, 32
    %v438 = vpop.permute.xlu0 %437
    %v440 = vadd.f32 %v430, %v438
    %441 = vset.pattern.permute.xlu0 31
    %442 = vperm.xlu0 %441, %v405
    %v443 = vpop.permute.xlu0 %442
    %v445 = vmul.f32 %v443, %v280
    %447 = vrot.lane.b32.xlu0 %v445, 32
    %v448 = vpop.permute.xlu0 %447
    %v450 = vadd.f32 %v440, %v448
    %v451 = vxor.u32 %v450, 2147483648
    %v452 = vmul.f32 %v451, 1.442695
    %v453 = vpow.pop %v452
    %v454 = vadd.f32 %v453, 1.0
    %v455 = vrcp.pop %v454
    %v456 = vmul.f32 %v454, %v455
    %v457 = vsub.f32 1.0, %v456
    %v458 = vmul.f32 %v455, %v457
    %v459 = vadd.f32 %v455, %v458
    %vm460 = vweird.f32 %v454
    %vm461 = vweird.f32 %v455
    %vm462 = vmor %vm460, %vm461
    %v463 = vsel %vm462, %v455, %v459
    %v464 = vand.u32 2147483647, %v454
    %vm465 = vcmp.eq.f32.partialorder %v464, 8.507059e+37
    %v466 = vand.u32 %v454, 2147483648
    %v467 = vor.u32 1.1754944e-38, %v466
    %v468 = vsel %vm465, %v467, %v463
    %v469 = vmul.f32 1.0, %v468
    %v470 = vtanh.pop %v450
    %472 = vrot.lane.b32.xlu0 %v399, 16
    %v473 = vpop.permute.xlu0 %472
    %v475 = vmul.f32 %v469, %v473
    %477 = vrot.lane.b32.xlu0 %v470, 120
    %v478 = vpop.permute.xlu0 %477
    %v480 = vmul.f32 %v469, %v478
    %482 = vrot.lane.b32.xlu0 %v480, 4
    %v483 = vpop.permute.xlu0 %482
    %v485 = vadd.f32 %v475, %v483
    %v486 = vtanh.pop %v485
    %488 = vrot.lane.b32.xlu0 %v486, 8
    %v489 = vpop.permute.xlu0 %488
    %v491 = vmul.f32 %v469, %v489
    %493 = vrot.lane.b32.xlu0 %v491, 92
    %v494 = vpop.permute.xlu0 %493
    %496 = vst.msk [vmem:[#allocation3] sm:$0xf] %vm60, %v494
    %497 = vset.pattern.permute.xlu0 44
    %498 = vperm.xlu0 %497, %v491
    %v499 = vpop.permute.xlu0 %498
    %v501 = vmul.f32 %v499, %v271
    %503 = vrot.lane.b32.xlu0 %v501, 48
    %v504 = vpop.permute.xlu0 %503
    %v506 = vadd.f32 %v248, %v504
    %507 = vset.pattern.permute.xlu0 45
    %508 = vperm.xlu0 %507, %v491
    %v509 = vpop.permute.xlu0 %508
    %v511 = vmul.f32 %v509, %v274
    %513 = vrot.lane.b32.xlu0 %v511, 48
    %v514 = vpop.permute.xlu0 %513
    %v516 = vadd.f32 %v506, %v514
    %517 = vset.pattern.permute.xlu0 46
    %518 = vperm.xlu0 %517, %v491
    %v519 = vpop.permute.xlu0 %518
    %v521 = vmul.f32 %v519, %v277
    %523 = vrot.lane.b32.xlu0 %v521, 48
    %v524 = vpop.permute.xlu0 %523
    %v526 = vadd.f32 %v516, %v524
    %527 = vset.pattern.permute.xlu0 47
    %528 = vperm.xlu0 %527, %v491
    %v529 = vpop.permute.xlu0 %528
    %v531 = vmul.f32 %v529, %v280
    %533 = vrot.lane.b32.xlu0 %v531, 48
    %v534 = vpop.permute.xlu0 %533
    %v536 = vadd.f32 %v526, %v534
    %v537 = vxor.u32 %v536, 2147483648
    %v538 = vmul.f32 %v537, 1.442695
    %v539 = vpow.pop %v538
    %v540 = vadd.f32 %v539, 1.0
    %v541 = vrcp.pop %v540
    %v542 = vmul.f32 %v540, %v541
    %v543 = vsub.f32 1.0, %v542
    %v544 = vmul.f32 %v541, %v543
    %v545 = vadd.f32 %v541, %v544
    %vm546 = vweird.f32 %v540
    %vm547 = vweird.f32 %v541
    %vm548 = vmor %vm546, %vm547
    %v549 = vsel %vm548, %v541, %v545
    %v550 = vand.u32 2147483647, %v540
    %vm551 = vcmp.eq.f32.partialorder %v550, 8.507059e+37
    %v552 = vand.u32 %v540, 2147483648
    %v553 = vor.u32 1.1754944e-38, %v552
    %v554 = vsel %vm551, %v553, %v549
    %v555 = vmul.f32 1.0, %v554
    %v556 = vtanh.pop %v536
    %558 = vrot.lane.b32.xlu0 %v485, 16
    %v559 = vpop.permute.xlu0 %558
    %v561 = vmul.f32 %v555, %v559
    %563 = vrot.lane.b32.xlu0 %v556, 120
    %v564 = vpop.permute.xlu0 %563
    %v566 = vmul.f32 %v555, %v564
    %568 = vrot.lane.b32.xlu0 %v566, 4
    %v569 = vpop.permute.xlu0 %568
    %v571 = vadd.f32 %v561, %v569
    %v572 = vtanh.pop %v571
    %574 = vrot.lane.b32.xlu0 %v572, 8
    %v575 = vpop.permute.xlu0 %574
    %v577 = vmul.f32 %v555, %v575
    %579 = vrot.lane.b32.xlu0 %v577, 80
    %v580 = vpop.permute.xlu0 %579
    %582 = vst.msk [vmem:[#allocation3] sm:$0xf] %vm65, %v580
    %583 = vset.pattern.permute.xlu0 60
    %584 = vperm.xlu0 %583, %v577
    %v585 = vpop.permute.xlu0 %584
    %v587 = vmul.f32 %v585, %v271
    %589 = vrot.lane.b32.xlu0 %v587, 64
    %v590 = vpop.permute.xlu0 %589
    %v592 = vadd.f32 %v248, %v590
    %593 = vset.pattern.permute.xlu0 61
    %594 = vperm.xlu0 %593, %v577
    %v595 = vpop.permute.xlu0 %594
    %v597 = vmul.f32 %v595, %v274
    %599 = vrot.lane.b32.xlu0 %v597, 64
    %v600 = vpop.permute.xlu0 %599
    %v602 = vadd.f32 %v592, %v600
    %603 = vset.pattern.permute.xlu0 62
    %604 = vperm.xlu0 %603, %v577
    %v605 = vpop.permute.xlu0 %604
    %v607 = vmul.f32 %v605, %v277
    %609 = vrot.lane.b32.xlu0 %v607, 64
    %v610 = vpop.permute.xlu0 %609
    %v612 = vadd.f32 %v602, %v610
    %613 = vset.pattern.permute.xlu0 63
    %614 = vperm.xlu0 %613, %v577
    %v615 = vpop.permute.xlu0 %614
    %v617 = vmul.f32 %v615, %v280
    %619 = vrot.lane.b32.xlu0 %v617, 64
    %v620 = vpop.permute.xlu0 %619
    %v622 = vadd.f32 %v612, %v620
    %v623 = vxor.u32 %v622, 2147483648
    %v624 = vmul.f32 %v623, 1.442695
    %v625 = vpow.pop %v624
    %v626 = vadd.f32 %v625, 1.0
    %v627 = vrcp.pop %v626
    %v628 = vmul.f32 %v626, %v627
    %v629 = vsub.f32 1.0, %v628
    %v630 = vmul.f32 %v627, %v629
    %v631 = vadd.f32 %v627, %v630
    %vm632 = vweird.f32 %v626
    %vm633 = vweird.f32 %v627
    %vm634 = vmor %vm632, %vm633
    %v635 = vsel %vm634, %v627, %v631
    %v636 = vand.u32 2147483647, %v626
    %vm637 = vcmp.eq.f32.partialorder %v636, 8.507059e+37
    %v638 = vand.u32 %v626, 2147483648
    %v639 = vor.u32 1.1754944e-38, %v638
    %v640 = vsel %vm637, %v639, %v635
    %v641 = vmul.f32 1.0, %v640
    %v642 = vtanh.pop %v622
    %644 = vrot.lane.b32.xlu0 %v571, 16
    %v645 = vpop.permute.xlu0 %644
    %v647 = vmul.f32 %v641, %v645
    %649 = vrot.lane.b32.xlu0 %v642, 120
    %v650 = vpop.permute.xlu0 %649
    %v652 = vmul.f32 %v641, %v650
    %654 = vrot.lane.b32.xlu0 %v652, 4
    %v655 = vpop.permute.xlu0 %654
    %v657 = vadd.f32 %v647, %v655
    %v658 = vtanh.pop %v657
    %660 = vrot.lane.b32.xlu0 %v658, 8
    %v661 = vpop.permute.xlu0 %660
    %v663 = vmul.f32 %v641, %v661
    %665 = vrot.lane.b32.xlu0 %v663, 68
    %v666 = vpop.permute.xlu0 %665
    %668 = vst.msk [vmem:[#allocation3] sm:$0xf] %vm70, %v666
    %669 = vset.pattern.permute.xlu0 76
    %670 = vperm.xlu0 %669, %v663
    %v671 = vpop.permute.xlu0 %670
    %v673 = vmul.f32 %v671, %v271
    %675 = vrot.lane.b32.xlu0 %v673, 80
    %v676 = vpop.permute.xlu0 %675
    %v678 = vadd.f32 %v248, %v676
    %679 = vset.pattern.permute.xlu0 77
    %680 = vperm.xlu0 %679, %v663
    %v681 = vpop.permute.xlu0 %680
    %v683 = vmul.f32 %v681, %v274
    %685 = vrot.lane.b32.xlu0 %v683, 80
    %v686 = vpop.permute.xlu0 %685
    %v688 = vadd.f32 %v678, %v686
    %689 = vset.pattern.permute.xlu0 78
    %690 = vperm.xlu0 %689, %v663
    %v691 = vpop.permute.xlu0 %690
    %v693 = vmul.f32 %v691, %v277
    %695 = vrot.lane.b32.xlu0 %v693, 80
    %v696 = vpop.permute.xlu0 %695
    %v698 = vadd.f32 %v688, %v696
    %699 = vset.pattern.permute.xlu0 79
    %700 = vperm.xlu0 %699, %v663
    %v701 = vpop.permute.xlu0 %700
    %v703 = vmul.f32 %v701, %v280
    %705 = vrot.lane.b32.xlu0 %v703, 80
    %v706 = vpop.permute.xlu0 %705
    %v708 = vadd.f32 %v698, %v706
    %v709 = vxor.u32 %v708, 2147483648
    %v710 = vmul.f32 %v709, 1.442695
    %v711 = vpow.pop %v710
    %v712 = vadd.f32 %v711, 1.0
    %v713 = vrcp.pop %v712
    %v714 = vmul.f32 %v712, %v713
    %v715 = vsub.f32 1.0, %v714
    %v716 = vmul.f32 %v713, %v715
    %v717 = vadd.f32 %v713, %v716
    %vm718 = vweird.f32 %v712
    %vm719 = vweird.f32 %v713
    %vm720 = vmor %vm718, %vm719
    %v721 = vsel %vm720, %v713, %v717
    %v722 = vand.u32 2147483647, %v712
    %vm723 = vcmp.eq.f32.partialorder %v722, 8.507059e+37
    %v724 = vand.u32 %v712, 2147483648
    %v725 = vor.u32 1.1754944e-38, %v724
    %v726 = vsel %vm723, %v725, %v721
    %v727 = vmul.f32 1.0, %v726
    %v728 = vtanh.pop %v708
    %730 = vrot.lane.b32.xlu0 %v657, 16
    %v731 = vpop.permute.xlu0 %730
    %v733 = vmul.f32 %v727, %v731
    %735 = vrot.lane.b32.xlu0 %v728, 120
    %v736 = vpop.permute.xlu0 %735
    %v738 = vmul.f32 %v727, %v736
    %740 = vrot.lane.b32.xlu0 %v738, 4
    %v741 = vpop.permute.xlu0 %740
    %v743 = vadd.f32 %v733, %v741
    %v744 = vtanh.pop %v743
    %746 = vrot.lane.b32.xlu0 %v744, 8
    %v747 = vpop.permute.xlu0 %746
    %v749 = vmul.f32 %v727, %v747
    %751 = vrot.lane.b32.xlu0 %v749, 56
    %v752 = vpop.permute.xlu0 %751
    %754 = vst.msk [vmem:[#allocation3] sm:$0xf] %vm75, %v752
    %755 = vset.pattern.permute.xlu0 92
    %756 = vperm.xlu0 %755, %v749
    %v757 = vpop.permute.xlu0 %756
    %v759 = vmul.f32 %v757, %v271
    %761 = vrot.lane.b32.xlu0 %v759, 96
    %v762 = vpop.permute.xlu0 %761
    %v764 = vadd.f32 %v248, %v762
    %765 = vset.pattern.permute.xlu0 93
    %766 = vperm.xlu0 %765, %v749
    %v767 = vpop.permute.xlu0 %766
    %v769 = vmul.f32 %v767, %v274
    %771 = vrot.lane.b32.xlu0 %v769, 96
    %v772 = vpop.permute.xlu0 %771
    %v774 = vadd.f32 %v764, %v772
    %775 = vset.pattern.permute.xlu0 94
    %776 = vperm.xlu0 %775, %v749
    %v777 = vpop.permute.xlu0 %776
    %v779 = vmul.f32 %v777, %v277
    %781 = vrot.lane.b32.xlu0 %v779, 96
    %v782 = vpop.permute.xlu0 %781
    %v784 = vadd.f32 %v774, %v782
    %785 = vset.pattern.permute.xlu0 95
    %786 = vperm.xlu0 %785, %v749
    %v787 = vpop.permute.xlu0 %786
    %v789 = vmul.f32 %v787, %v280
    %791 = vrot.lane.b32.xlu0 %v789, 96
    %v792 = vpop.permute.xlu0 %791
    %v794 = vadd.f32 %v784, %v792
    %v795 = vxor.u32 %v794, 2147483648
    %v796 = vmul.f32 %v795, 1.442695
    %v797 = vpow.pop %v796
    %v798 = vadd.f32 %v797, 1.0
    %v799 = vrcp.pop %v798
    %v800 = vmul.f32 %v798, %v799
    %v801 = vsub.f32 1.0, %v800
    %v802 = vmul.f32 %v799, %v801
    %v803 = vadd.f32 %v799, %v802
    %vm804 = vweird.f32 %v798
    %vm805 = vweird.f32 %v799
    %vm806 = vmor %vm804, %vm805
    %v807 = vsel %vm806, %v799, %v803
    %v808 = vand.u32 2147483647, %v798
    %vm809 = vcmp.eq.f32.partialorder %v808, 8.507059e+37
    %v810 = vand.u32 %v798, 2147483648
    %v811 = vor.u32 1.1754944e-38, %v810
    %v812 = vsel %vm809, %v811, %v807
    %v813 = vmul.f32 1.0, %v812
    %v814 = vtanh.pop %v794
    %816 = vrot.lane.b32.xlu0 %v743, 16
    %v817 = vpop.permute.xlu0 %816
    %v819 = vmul.f32 %v813, %v817
    %821 = vrot.lane.b32.xlu0 %v814, 120
    %v822 = vpop.permute.xlu0 %821
    %v824 = vmul.f32 %v813, %v822
    %826 = vrot.lane.b32.xlu0 %v824, 4
    %v827 = vpop.permute.xlu0 %826
    %v829 = vadd.f32 %v819, %v827
    %v830 = vtanh.pop %v829
    %832 = vrot.lane.b32.xlu0 %v830, 8
    %v833 = vpop.permute.xlu0 %832
    %v835 = vmul.f32 %v813, %v833
    %837 = vrot.lane.b32.xlu0 %v835, 44
    %v838 = vpop.permute.xlu0 %837
    %840 = vst.msk [vmem:[#allocation3] sm:$0xf] %vm80, %v838
    %841 = vset.pattern.permute.xlu0 108
    %842 = vperm.xlu0 %841, %v835
    %v843 = vpop.permute.xlu0 %842
    %v845 = vmul.f32 %v843, %v271
    %847 = vrot.lane.b32.xlu0 %v845, 112
    %v848 = vpop.permute.xlu0 %847
    %v850 = vadd.f32 %v248, %v848
    %851 = vset.pattern.permute.xlu0 109
    %852 = vperm.xlu0 %851, %v835
    %v853 = vpop.permute.xlu0 %852
    %v855 = vmul.f32 %v853, %v274
    %857 = vrot.lane.b32.xlu0 %v855, 112
    %v858 = vpop.permute.xlu0 %857
    %v860 = vadd.f32 %v850, %v858
    %861 = vset.pattern.permute.xlu0 110
    %862 = vperm.xlu0 %861, %v835
    %v863 = vpop.permute.xlu0 %862
    %v865 = vmul.f32 %v863, %v277
    %867 = vrot.lane.b32.xlu0 %v865, 112
    %v868 = vpop.permute.xlu0 %867
    %v870 = vadd.f32 %v860, %v868
    %871 = vset.pattern.permute.xlu0 111
    %872 = vperm.xlu0 %871, %v835
    %v873 = vpop.permute.xlu0 %872
    %v875 = vmul.f32 %v873, %v280
    %877 = vrot.lane.b32.xlu0 %v875, 112
    %v878 = vpop.permute.xlu0 %877
    %v880 = vadd.f32 %v870, %v878
    %v881 = vxor.u32 %v880, 2147483648
    %v882 = vmul.f32 %v881, 1.442695
    %v883 = vpow.pop %v882
    %v884 = vadd.f32 %v883, 1.0
    %v885 = vrcp.pop %v884
    %v886 = vmul.f32 %v884, %v885
    %v887 = vsub.f32 1.0, %v886
    %v888 = vmul.f32 %v885, %v887
    %v889 = vadd.f32 %v885, %v888
    %vm890 = vweird.f32 %v884
    %vm891 = vweird.f32 %v885
    %vm892 = vmor %vm890, %vm891
    %v893 = vsel %vm892, %v885, %v889
    %v894 = vand.u32 2147483647, %v884
    %vm895 = vcmp.eq.f32.partialorder %v894, 8.507059e+37
    %v896 = vand.u32 %v884, 2147483648
    %v897 = vor.u32 1.1754944e-38, %v896
    %v898 = vsel %vm895, %v897, %v893
    %v899 = vmul.f32 1.0, %v898
    %v900 = vtanh.pop %v880
    %902 = vrot.lane.b32.xlu0 %v829, 16
    %v903 = vpop.permute.xlu0 %902
    %v905 = vmul.f32 %v899, %v903
    %907 = vrot.lane.b32.xlu0 %v900, 120
    %v908 = vpop.permute.xlu0 %907
    %v910 = vmul.f32 %v899, %v908
    %912 = vrot.lane.b32.xlu0 %v910, 4
    %v913 = vpop.permute.xlu0 %912
    %v915 = vadd.f32 %v905, %v913
    %v916 = vtanh.pop %v915
    %918 = vrot.lane.b32.xlu0 %v916, 8
    %v919 = vpop.permute.xlu0 %918
    %v921 = vmul.f32 %v899, %v919
    %923 = vrot.lane.b32.xlu0 %v921, 32
    %v924 = vpop.permute.xlu0 %923
    %926 = vst.msk [vmem:[#allocation3] sm:$0xf] %vm85, %v924
    %927 = vset.pattern.permute.xlu0 124
    %928 = vperm.xlu0 %927, %v921
    %v929 = vpop.permute.xlu0 %928
    %v931 = vmul.f32 %v929, %v271
    %v932 = vadd.f32 %v268, %v931
    %933 = vset.pattern.permute.xlu0 125
    %934 = vperm.xlu0 %933, %v921
    %v935 = vpop.permute.xlu0 %934
    %v937 = vmul.f32 %v935, %v274
    %v938 = vadd.f32 %v932, %v937
    %939 = vset.pattern.permute.xlu0 126
    %940 = vperm.xlu0 %939, %v921
    %v941 = vpop.permute.xlu0 %940
    %v943 = vmul.f32 %v941, %v277
    %v944 = vadd.f32 %v938, %v943
    %945 = vset.pattern.permute.xlu0 127
    %946 = vperm.xlu0 %945, %v921
    %v947 = vpop.permute.xlu0 %946
    %v949 = vmul.f32 %v947, %v280
    %v950 = vadd.f32 %v944, %v949
    %v951 = vxor.u32 %v950, 2147483648
    %v952 = vmul.f32 %v951, 1.442695
    %v953 = vpow.pop %v952
    %v954 = vadd.f32 %v953, 1.0
    %v955 = vrcp.pop %v954
    %v956 = vmul.f32 %v954, %v955
    %v957 = vsub.f32 1.0, %v956
    %v958 = vmul.f32 %v955, %v957
    %v959 = vadd.f32 %v955, %v958
    %vm960 = vweird.f32 %v954
    %vm961 = vweird.f32 %v955
    %vm962 = vmor %vm960, %vm961
    %v963 = vsel %vm962, %v955, %v959
    %v964 = vand.u32 2147483647, %v954
    %vm965 = vcmp.eq.f32.partialorder %v964, 8.507059e+37
    %v966 = vand.u32 %v954, 2147483648
    %v967 = vor.u32 1.1754944e-38, %v966
    %v968 = vsel %vm965, %v967, %v963
    %v969 = vmul.f32 1.0, %v968
    %v970 = vtanh.pop %v950
    %972 = vrot.lane.b32.xlu0 %v915, 16
    %v973 = vpop.permute.xlu0 %972
    %v975 = vmul.f32 %v969, %v973
    %977 = vrot.lane.b32.xlu0 %v970, 120
    %v978 = vpop.permute.xlu0 %977
    %v980 = vmul.f32 %v969, %v978
    %982 = vrot.lane.b32.xlu0 %v980, 4
    %v983 = vpop.permute.xlu0 %982
    %v985 = vadd.f32 %v975, %v983
    %v986 = vtanh.pop %v985
    %988 = vrot.lane.b32.xlu0 %v986, 8
    %v989 = vpop.permute.xlu0 %988
    %v991 = vmul.f32 %v969, %v989
    %993 = vrot.lane.b32.xlu0 %v991, 20
    %v994 = vpop.permute.xlu0 %993
    %996 = vst.msk [vmem:[#allocation3] sm:$0xf] %vm90, %v994
    %997 = vset.pattern.permute.xlu0 12
    %998 = vperm.xlu0 %997, %v991
    %v999 = vpop.permute.xlu0 %998
    %v1001 = vmul.f32 %v999, %v271
    %1003 = vrot.lane.b32.xlu0 %v1001, 16
    %v1004 = vpop.permute.xlu0 %1003
    %v1006 = vadd.f32 %v268, %v1004
    %1007 = vset.pattern.permute.xlu0 13
    %1008 = vperm.xlu0 %1007, %v991
    %v1009 = vpop.permute.xlu0 %1008
    %v1011 = vmul.f32 %v1009, %v274
    %1013 = vrot.lane.b32.xlu0 %v1011, 16
    %v1014 = vpop.permute.xlu0 %1013
    %v1016 = vadd.f32 %v1006, %v1014
    %1017 = vset.pattern.permute.xlu0 14
    %1018 = vperm.xlu0 %1017, %v991
    %v1019 = vpop.permute.xlu0 %1018
    %v1021 = vmul.f32 %v1019, %v277
    %1023 = vrot.lane.b32.xlu0 %v1021, 16
    %v1024 = vpop.permute.xlu0 %1023
    %v1026 = vadd.f32 %v1016, %v1024
    %1027 = vset.pattern.permute.xlu0 15
    %1028 = vperm.xlu0 %1027, %v991
    %v1029 = vpop.permute.xlu0 %1028
    %v1031 = vmul.f32 %v1029, %v280
    %1033 = vrot.lane.b32.xlu0 %v1031, 16
    %v1034 = vpop.permute.xlu0 %1033
    %v1036 = vadd.f32 %v1026, %v1034
    %v1037 = vxor.u32 %v1036, 2147483648
    %v1038 = vmul.f32 %v1037, 1.442695
    %v1039 = vpow.pop %v1038
    %v1040 = vadd.f32 %v1039, 1.0
    %v1041 = vrcp.pop %v1040
    %v1042 = vmul.f32 %v1040, %v1041
    %v1043 = vsub.f32 1.0, %v1042
    %v1044 = vmul.f32 %v1041, %v1043
    %v1045 = vadd.f32 %v1041, %v1044
    %vm1046 = vweird.f32 %v1040
    %vm1047 = vweird.f32 %v1041
    %vm1048 = vmor %vm1046, %vm1047
    %v1049 = vsel %vm1048, %v1041, %v1045
    %v1050 = vand.u32 2147483647, %v1040
    %vm1051 = vcmp.eq.f32.partialorder %v1050, 8.507059e+37
    %v1052 = vand.u32 %v1040, 2147483648
    %v1053 = vor.u32 1.1754944e-38, %v1052
    %v1054 = vsel %vm1051, %v1053, %v1049
    %v1055 = vmul.f32 1.0, %v1054
    %v1056 = vtanh.pop %v1036
    %1058 = vrot.lane.b32.xlu0 %v985, 16
    %v1059 = vpop.permute.xlu0 %1058
    %v1061 = vmul.f32 %v1055, %v1059
    %1063 = vrot.lane.b32.xlu0 %v1056, 120
    %v1064 = vpop.permute.xlu0 %1063
    %v1066 = vmul.f32 %v1055, %v1064
    %1068 = vrot.lane.b32.xlu0 %v1066, 4
    %v1069 = vpop.permute.xlu0 %1068
    %v1071 = vadd.f32 %v1061, %v1069
    %v1072 = vtanh.pop %v1071
    %1074 = vrot.lane.b32.xlu0 %v1072, 8
    %v1075 = vpop.permute.xlu0 %1074
    %v1077 = vmul.f32 %v1055, %v1075
    %1079 = vrot.lane.b32.xlu0 %v1077, 8
    %v1080 = vpop.permute.xlu0 %1079
    %1082 = vst.msk [vmem:[#allocation3] sm:$0xf] %vm95, %v1080
    %1083 = vset.pattern.permute.xlu0 28
    %1084 = vperm.xlu0 %1083, %v1077
    %v1085 = vpop.permute.xlu0 %1084
    %v1087 = vmul.f32 %v1085, %v271
    %1089 = vrot.lane.b32.xlu0 %v1087, 32
    %v1090 = vpop.permute.xlu0 %1089
    %v1092 = vadd.f32 %v268, %v1090
    %1093 = vset.pattern.permute.xlu0 29
    %1094 = vperm.xlu0 %1093, %v1077
    %v1095 = vpop.permute.xlu0 %1094
    %v1097 = vmul.f32 %v1095, %v274
    %1099 = vrot.lane.b32.xlu0 %v1097, 32
    %v1100 = vpop.permute.xlu0 %1099
    %v1102 = vadd.f32 %v1092, %v1100
    %1103 = vset.pattern.permute.xlu0 30
    %1104 = vperm.xlu0 %1103, %v1077
    %v1105 = vpop.permute.xlu0 %1104
    %v1107 = vmul.f32 %v1105, %v277
    %1109 = vrot.lane.b32.xlu0 %v1107, 32
    %v1110 = vpop.permute.xlu0 %1109
    %v1112 = vadd.f32 %v1102, %v1110
    %1113 = vset.pattern.permute.xlu0 31
    %1114 = vperm.xlu0 %1113, %v1077
    %v1115 = vpop.permute.xlu0 %1114
    %v1117 = vmul.f32 %v1115, %v280
    %1119 = vrot.lane.b32.xlu0 %v1117, 32
    %v1120 = vpop.permute.xlu0 %1119
    %v1122 = vadd.f32 %v1112, %v1120
    %v1123 = vxor.u32 %v1122, 2147483648
    %v1124 = vmul.f32 %v1123, 1.442695
    %v1125 = vpow.pop %v1124
    %v1126 = vadd.f32 %v1125, 1.0
    %v1127 = vrcp.pop %v1126
    %v1128 = vmul.f32 %v1126, %v1127
    %v1129 = vsub.f32 1.0, %v1128
    %v1130 = vmul.f32 %v1127, %v1129
    %v1131 = vadd.f32 %v1127, %v1130
    %vm1132 = vweird.f32 %v1126
    %vm1133 = vweird.f32 %v1127
    %vm1134 = vmor %vm1132, %vm1133
    %v1135 = vsel %vm1134, %v1127, %v1131
    %v1136 = vand.u32 2147483647, %v1126
    %vm1137 = vcmp.eq.f32.partialorder %v1136, 8.507059e+37
    %v1138 = vand.u32 %v1126, 2147483648
    %v1139 = vor.u32 1.1754944e-38, %v1138
    %v1140 = vsel %vm1137, %v1139, %v1135
    %v1141 = vmul.f32 1.0, %v1140
    %v1142 = vtanh.pop %v1122
    %1144 = vrot.lane.b32.xlu0 %v1071, 16
    %v1145 = vpop.permute.xlu0 %1144
    %v1147 = vmul.f32 %v1141, %v1145
    %1149 = vrot.lane.b32.xlu0 %v1142, 120
    %v1150 = vpop.permute.xlu0 %1149
    %v1152 = vmul.f32 %v1141, %v1150
    %1154 = vrot.lane.b32.xlu0 %v1152, 4
    %v1155 = vpop.permute.xlu0 %1154
    %v1157 = vadd.f32 %v1147, %v1155
    %v1158 = vtanh.pop %v1157
    %1160 = vrot.lane.b32.xlu0 %v1158, 8
    %v1161 = vpop.permute.xlu0 %1160
    %v1163 = vmul.f32 %v1141, %v1161
    %1165 = vrot.lane.b32.xlu0 %v1163, 124
    %v1166 = vpop.permute.xlu0 %1165
    %1168 = vst.msk [vmem:[#allocation3] sm:$0xf] %vm100, %v1166
    %1169 = vset.pattern.permute.xlu0 44
    %1170 = vperm.xlu0 %1169, %v1163
    %v1171 = vpop.permute.xlu0 %1170
    %v1173 = vmul.f32 %v1171, %v271
    %1175 = vrot.lane.b32.xlu0 %v1173, 48
    %v1176 = vpop.permute.xlu0 %1175
    %v1178 = vadd.f32 %v268, %v1176
    %1179 = vset.pattern.permute.xlu0 45
    %1180 = vperm.xlu0 %1179, %v1163
    %v1181 = vpop.permute.xlu0 %1180
    %v1183 = vmul.f32 %v1181, %v274
    %1185 = vrot.lane.b32.xlu0 %v1183, 48
    %v1186 = vpop.permute.xlu0 %1185
    %v1188 = vadd.f32 %v1178, %v1186
    %1189 = vset.pattern.permute.xlu0 46
    %1190 = vperm.xlu0 %1189, %v1163
    %v1191 = vpop.permute.xlu0 %1190
    %v1193 = vmul.f32 %v1191, %v277
    %1195 = vrot.lane.b32.xlu0 %v1193, 48
    %v1196 = vpop.permute.xlu0 %1195
    %v1198 = vadd.f32 %v1188, %v1196
    %1199 = vset.pattern.permute.xlu0 47
    %1200 = vperm.xlu0 %1199, %v1163
    %v1201 = vpop.permute.xlu0 %1200
    %v1203 = vmul.f32 %v1201, %v280
    %1205 = vrot.lane.b32.xlu0 %v1203, 48
    %v1206 = vpop.permute.xlu0 %1205
    %v1208 = vadd.f32 %v1198, %v1206
    %v1209 = vxor.u32 %v1208, 2147483648
    %v1210 = vmul.f32 %v1209, 1.442695
    %v1211 = vpow.pop %v1210
    %v1212 = vadd.f32 %v1211, 1.0
    %v1213 = vrcp.pop %v1212
    %v1214 = vmul.f32 %v1212, %v1213
    %v1215 = vsub.f32 1.0, %v1214
    %v1216 = vmul.f32 %v1213, %v1215
    %v1217 = vadd.f32 %v1213, %v1216
    %vm1218 = vweird.f32 %v1212
    %vm1219 = vweird.f32 %v1213
    %vm1220 = vmor %vm1218, %vm1219
    %v1221 = vsel %vm1220, %v1213, %v1217
    %v1222 = vand.u32 2147483647, %v1212
    %vm1223 = vcmp.eq.f32.partialorder %v1222, 8.507059e+37
    %v1224 = vand.u32 %v1212, 2147483648
    %v1225 = vor.u32 1.1754944e-38, %v1224
    %v1226 = vsel %vm1223, %v1225, %v1221
    %v1227 = vmul.f32 1.0, %v1226
    %v1228 = vtanh.pop %v1208
    %1230 = vrot.lane.b32.xlu0 %v1157, 16
    %v1231 = vpop.permute.xlu0 %1230
    %v1233 = vmul.f32 %v1227, %v1231
    %1235 = vrot.lane.b32.xlu0 %v1228, 120
    %v1236 = vpop.permute.xlu0 %1235
    %v1238 = vmul.f32 %v1227, %v1236
    %1240 = vrot.lane.b32.xlu0 %v1238, 4
    %v1241 = vpop.permute.xlu0 %1240
    %v1243 = vadd.f32 %v1233, %v1241
    %v1244 = vtanh.pop %v1243
    %1246 = vrot.lane.b32.xlu0 %v1244, 8
    %v1247 = vpop.permute.xlu0 %1246
    %v1249 = vmul.f32 %v1227, %v1247
    %1251 = vrot.lane.b32.xlu0 %v1249, 112
    %v1252 = vpop.permute.xlu0 %1251
    %1254 = vst.msk [vmem:[#allocation3] sm:$0xf] %vm105, %v1252
    %1255 = vset.pattern.permute.xlu0 60
    %1256 = vperm.xlu0 %1255, %v1249
    %v1257 = vpop.permute.xlu0 %1256
    %v1259 = vmul.f32 %v1257, %v271
    %1261 = vrot.lane.b32.xlu0 %v1259, 64
    %v1262 = vpop.permute.xlu0 %1261
    %v1264 = vadd.f32 %v268, %v1262
    %1265 = vset.pattern.permute.xlu0 61
    %1266 = vperm.xlu0 %1265, %v1249
    %v1267 = vpop.permute.xlu0 %1266
    %v1269 = vmul.f32 %v1267, %v274
    %1271 = vrot.lane.b32.xlu0 %v1269, 64
    %v1272 = vpop.permute.xlu0 %1271
    %v1274 = vadd.f32 %v1264, %v1272
    %1275 = vset.pattern.permute.xlu0 62
    %1276 = vperm.xlu0 %1275, %v1249
    %v1277 = vpop.permute.xlu0 %1276
    %v1279 = vmul.f32 %v1277, %v277
    %1281 = vrot.lane.b32.xlu0 %v1279, 64
    %v1282 = vpop.permute.xlu0 %1281
    %v1284 = vadd.f32 %v1274, %v1282
    %1285 = vset.pattern.permute.xlu0 63
    %1286 = vperm.xlu0 %1285, %v1249
    %v1287 = vpop.permute.xlu0 %1286
    %v1289 = vmul.f32 %v1287, %v280
    %1291 = vrot.lane.b32.xlu0 %v1289, 64
    %v1292 = vpop.permute.xlu0 %1291
    %v1294 = vadd.f32 %v1284, %v1292
    %v1295 = vxor.u32 %v1294, 2147483648
    %v1296 = vmul.f32 %v1295, 1.442695
    %v1297 = vpow.pop %v1296
    %v1298 = vadd.f32 %v1297, 1.0
    %v1299 = vrcp.pop %v1298
    %v1300 = vmul.f32 %v1298, %v1299
    %v1301 = vsub.f32 1.0, %v1300
    %v1302 = vmul.f32 %v1299, %v1301
    %v1303 = vadd.f32 %v1299, %v1302
    %vm1304 = vweird.f32 %v1298
    %vm1305 = vweird.f32 %v1299
    %vm1306 = vmor %vm1304, %vm1305
    %v1307 = vsel %vm1306, %v1299, %v1303
    %v1308 = vand.u32 2147483647, %v1298
    %vm1309 = vcmp.eq.f32.partialorder %v1308, 8.507059e+37
    %v1310 = vand.u32 %v1298, 2147483648
    %v1311 = vor.u32 1.1754944e-38, %v1310
    %v1312 = vsel %vm1309, %v1311, %v1307
    %v1313 = vmul.f32 1.0, %v1312
    %v1314 = vtanh.pop %v1294
    %1316 = vrot.lane.b32.xlu0 %v1243, 16
    %v1317 = vpop.permute.xlu0 %1316
    %v1319 = vmul.f32 %v1313, %v1317
    %1321 = vrot.lane.b32.xlu0 %v1314, 120
    %v1322 = vpop.permute.xlu0 %1321
    %v1324 = vmul.f32 %v1313, %v1322
    %1326 = vrot.lane.b32.xlu0 %v1324, 4
    %v1327 = vpop.permute.xlu0 %1326
    %v1329 = vadd.f32 %v1319, %v1327
    %v1330 = vtanh.pop %v1329
    %1332 = vrot.lane.b32.xlu0 %v1330, 8
    %v1333 = vpop.permute.xlu0 %1332
    %v1335 = vmul.f32 %v1313, %v1333
    %1337 = vrot.lane.b32.xlu0 %v1335, 100
    %v1338 = vpop.permute.xlu0 %1337
    %1340 = vst.msk [vmem:[#allocation3] sm:$0xf] %vm110, %v1338
    %v1341 = vld [vmem:[#allocation3] sm:$0xf]
    %v1342 = vld [vmem:[%s8] sm:$0x1]
    %v1344 = vperm.slane %v1342, 0
    %v1346 = vmul.f32 %v1341, %v1344
    %v1347 = vld [vmem:[%s9] sm:$0x1]
    %v1349 = vperm.slane %v1347, 0
    %v1351 = vadd.f32 %v1346, %v1349
    %v1352 = vadd.f32 %v1351, %v206
    %v1353 = vld [vmem:[%s10] sm:$0xff]
    %v1354 = vld [vmem:[%s10 + $0x8] sm:$0xff]
    %v1355 = vld [vmem:[%s10 + $0x10] sm:$0xff]
    %v1356 = vld [vmem:[%s10 + $0x18] sm:$0xff]
    %v1357 = vld [vmem:[%s10 + $0x20] sm:$0xff]
    %v1358 = vld [vmem:[%s10 + $0x28] sm:$0xff]
    %v1359 = vld [vmem:[%s10 + $0x30] sm:$0xff]
    %v1360 = vld [vmem:[%s10 + $0x38] sm:$0xff]
    %v1361 = vld [vmem:[%s10 + $0x40] sm:$0xff]
    %v1362 = vld [vmem:[%s10 + $0x48] sm:$0xff]
    %v1363 = vld [vmem:[%s10 + $0x50] sm:$0xff]
    %v1364 = vld [vmem:[%s10 + $0x58] sm:$0xff]
    %v1365 = vld [vmem:[%s10 + $0x60] sm:$0xff]
    %v1366 = vld [vmem:[%s10 + $0x68] sm:$0xff]
    %v1367 = vld [vmem:[%s10 + $0x70] sm:$0xff]
    %v1368 = vld [vmem:[%s10 + $0x78] sm:$0xff]
    %v1369 = vld [vmem:[%s10 + $0x80] sm:$0xff]
    %v1370 = vld [vmem:[%s10 + $0x88] sm:$0xff]
    %v1371 = vld [vmem:[%s10 + $0x90] sm:$0xff]
    %v1372 = vld [vmem:[%s10 + $0x98] sm:$0xff]
    %v1373 = vld [vmem:[%s10 + $0xa0] sm:$0xff]
    %v1374 = vld [vmem:[%s10 + $0xa8] sm:$0xff]
    %v1375 = vld [vmem:[%s10 + $0xb0] sm:$0xff]
    %v1376 = vld [vmem:[%s10 + $0xb8] sm:$0xff]
    %v1377 = vld [vmem:[%s10 + $0xc0] sm:$0xf]
    %v1378 = vld [vmem:[%s10 + $0xc8] sm:$0xf]
    %v1379 = vld [vmem:[%s10 + $0xd0] sm:$0xf]
    %v1380 = vld [vmem:[%s10 + $0xd8] sm:$0xf]
    %v1381 = vld [vmem:[%s11] sm:$0xf]
    %v1383 = vperm.slane %v1381, 0
    %v1384 = vperm.slane %v1381, 1
    %v1385 = vperm.slane %v1381, 2
    %v1386 = vperm.slane %v1381, 3
    %v1392 = vsel %vm129, %v1352, 0
    %v1395 = vsel %vm133, %v1377, 0
    %v1398 = vsel %vm133, %v1378, 0
    %v1401 = vsel %vm133, %v1379, 0
    %v1404 = vsel %vm133, %v1380, 0
    %1406 = vmatpush.msra.mxu0 0.0
    %1407 = vmatpush.msra.mxu0 0.0
    %1408 = vmatpush.msra.mxu0 0.0
    %1409 = vmatpush.msra.mxu0 0.0
    %1410 = vmatpush.msra.mxu0 0.0
    %1411 = vmatpush.msra.mxu0 0.0
    %1412 = vmatpush.msra.mxu0 0.0
    %1413 = vmatpush.msra.mxu0 0.0
    %1414 = vmatpush.msra.mxu0 0.0
    %1415 = vmatpush.msra.mxu0 %v1395
    %1416 = vmatpush.msra.mxu0 %v1373
    %1417 = vmatpush.msra.mxu0 %v1369
    %1418 = vmatpush.msra.mxu0 %v1365
    %1419 = vmatpush.msra.mxu0 %v1361
    %1420 = vmatpush.msra.mxu0 %v1357
    %1421 = vmatpush.msra.mxu0 %v1353
    %1422 = vmatmul.f32.gmra.mxu0 %v1392
    %v1423 = vpop.f32.mrf.mxu0
    %v1424 = vadd.f32 %v1383, %v1423
    %1425 = vdwg.mxu0
    %1426 = vmatpush.msra.mxu0 0.0
    %1427 = vmatpush.msra.mxu0 0.0
    %1428 = vmatpush.msra.mxu0 0.0
    %1429 = vmatpush.msra.mxu0 0.0
    %1430 = vmatpush.msra.mxu0 0.0
    %1431 = vmatpush.msra.mxu0 0.0
    %1432 = vmatpush.msra.mxu0 0.0
    %1433 = vmatpush.msra.mxu0 0.0
    %1434 = vmatpush.msra.mxu0 0.0
    %1435 = vmatpush.msra.mxu0 %v1398
    %1436 = vmatpush.msra.mxu0 %v1374
    %1437 = vmatpush.msra.mxu0 %v1370
    %1438 = vmatpush.msra.mxu0 %v1366
    %1439 = vmatpush.msra.mxu0 %v1362
    %1440 = vmatpush.msra.mxu0 %v1358
    %1441 = vmatpush.msra.mxu0 %v1354
    %1442 = vmatmul.f32.gmra.mxu0 %v1392
    %v1443 = vpop.f32.mrf.mxu0
    %v1444 = vadd.f32 %v1384, %v1443
    %1445 = vdwg.mxu0
    %1446 = vmatpush.msra.mxu0 0.0
    %1447 = vmatpush.msra.mxu0 0.0
    %1448 = vmatpush.msra.mxu0 0.0
    %1449 = vmatpush.msra.mxu0 0.0
    %1450 = vmatpush.msra.mxu0 0.0
    %1451 = vmatpush.msra.mxu0 0.0
    %1452 = vmatpush.msra.mxu0 0.0
    %1453 = vmatpush.msra.mxu0 0.0
    %1454 = vmatpush.msra.mxu0 0.0
    %1455 = vmatpush.msra.mxu0 %v1401
    %1456 = vmatpush.msra.mxu0 %v1375
    %1457 = vmatpush.msra.mxu0 %v1371
    %1458 = vmatpush.msra.mxu0 %v1367
    %1459 = vmatpush.msra.mxu0 %v1363
    %1460 = vmatpush.msra.mxu0 %v1359
    %1461 = vmatpush.msra.mxu0 %v1355
    %1462 = vmatmul.f32.gmra.mxu0 %v1392
    %v1463 = vpop.f32.mrf.mxu0
    %v1464 = vadd.f32 %v1385, %v1463
    %1465 = vdwg.mxu0
    %1466 = vmatpush.msra.mxu0 0.0
    %1467 = vmatpush.msra.mxu0 0.0
    %1468 = vmatpush.msra.mxu0 0.0
    %1469 = vmatpush.msra.mxu0 0.0
    %1470 = vmatpush.msra.mxu0 0.0
    %1471 = vmatpush.msra.mxu0 0.0
    %1472 = vmatpush.msra.mxu0 0.0
    %1473 = vmatpush.msra.mxu0 0.0
    %1474 = vmatpush.msra.mxu0 0.0
    %1475 = vmatpush.msra.mxu0 %v1404
    %1476 = vmatpush.msra.mxu0 %v1376
    %1477 = vmatpush.msra.mxu0 %v1372
    %1478 = vmatpush.msra.mxu0 %v1368
    %1479 = vmatpush.msra.mxu0 %v1364
    %1480 = vmatpush.msra.mxu0 %v1360
    %1481 = vmatpush.msra.mxu0 %v1356
    %1482 = vmatmul.f32.gmra.mxu0 %v1392
    %v1483 = vpop.f32.mrf.mxu0
    %v1484 = vadd.f32 %v1386, %v1483
    %1485 = vdwg.mxu0
    %v1486 = vmul.f32 %v1424, 0.5
    %v1487 = vmul.f32 %v1444, 0.5
    %v1488 = vmul.f32 %v1464, 0.5
    %v1489 = vmul.f32 %v1484, 0.5
    %v1490 = vmul.f32 %v1424, 0.70710677
    %v1491 = vmul.f32 %v1444, 0.70710677
    %v1492 = vmul.f32 %v1464, 0.70710677
    %v1493 = vmul.f32 %v1484, 0.70710677
    %v1494 = vand.u32 2147483647, %v1490
    %v1495 = vand.u32 2147483647, %v1491
    %v1496 = vand.u32 2147483647, %v1492
    %v1497 = vand.u32 2147483647, %v1493
    %v1498 = vmul.f32 %v1494, 0.3275911
    %v1499 = vmul.f32 %v1495, 0.3275911
    %v1500 = vmul.f32 %v1496, 0.3275911
    %v1501 = vmul.f32 %v1497, 0.3275911
    %v1502 = vadd.f32 %v1498, 1.0
    %v1503 = vadd.f32 %v1499, 1.0
    %v1504 = vadd.f32 %v1500, 1.0
    %v1505 = vadd.f32 %v1501, 1.0
    %v1506 = vrcp.pop %v1502
    %v1507 = vmul.f32 %v1502, %v1506
    %v1508 = vsub.f32 1.0, %v1507
    %v1509 = vmul.f32 %v1506, %v1508
    %v1510 = vadd.f32 %v1506, %v1509
    %vm1511 = vweird.f32 %v1502
    %vm1512 = vweird.f32 %v1506
    %vm1513 = vmor %vm1511, %vm1512
    %v1514 = vsel %vm1513, %v1506, %v1510
    %v1515 = vand.u32 2147483647, %v1502
    %vm1516 = vcmp.eq.f32.partialorder %v1515, 8.507059e+37
    %v1517 = vand.u32 %v1502, 2147483648
    %v1518 = vor.u32 1.1754944e-38, %v1517
    %v1519 = vsel %vm1516, %v1518, %v1514
    %v1520 = vmul.f32 1.0, %v1519
    %v1521 = vrcp.pop %v1503
    %v1522 = vmul.f32 %v1503, %v1521
    %v1523 = vsub.f32 1.0, %v1522
    %v1524 = vmul.f32 %v1521, %v1523
    %v1525 = vadd.f32 %v1521, %v1524
    %vm1526 = vweird.f32 %v1503
    %vm1527 = vweird.f32 %v1521
    %vm1528 = vmor %vm1526, %vm1527
    %v1529 = vsel %vm1528, %v1521, %v1525
    %v1530 = vand.u32 2147483647, %v1503
    %vm1531 = vcmp.eq.f32.partialorder %v1530, 8.507059e+37
    %v1532 = vand.u32 %v1503, 2147483648
    %v1533 = vor.u32 1.1754944e-38, %v1532
    %v1534 = vsel %vm1531, %v1533, %v1529
    %v1535 = vmul.f32 1.0, %v1534
    %v1536 = vrcp.pop %v1504
    %v1537 = vmul.f32 %v1504, %v1536
    %v1538 = vsub.f32 1.0, %v1537
    %v1539 = vmul.f32 %v1536, %v1538
    %v1540 = vadd.f32 %v1536, %v1539
    %vm1541 = vweird.f32 %v1504
    %vm1542 = vweird.f32 %v1536
    %vm1543 = vmor %vm1541, %vm1542
    %v1544 = vsel %vm1543, %v1536, %v1540
    %v1545 = vand.u32 2147483647, %v1504
    %vm1546 = vcmp.eq.f32.partialorder %v1545, 8.507059e+37
    %v1547 = vand.u32 %v1504, 2147483648
    %v1548 = vor.u32 1.1754944e-38, %v1547
    %v1549 = vsel %vm1546, %v1548, %v1544
    %v1550 = vmul.f32 1.0, %v1549
    %v1551 = vrcp.pop %v1505
    %v1552 = vmul.f32 %v1505, %v1551
    %v1553 = vsub.f32 1.0, %v1552
    %v1554 = vmul.f32 %v1551, %v1553
    %v1555 = vadd.f32 %v1551, %v1554
    %vm1556 = vweird.f32 %v1505
    %vm1557 = vweird.f32 %v1551
    %vm1558 = vmor %vm1556, %vm1557
    %v1559 = vsel %vm1558, %v1551, %v1555
    %v1560 = vand.u32 2147483647, %v1505
    %vm1561 = vcmp.eq.f32.partialorder %v1560, 8.507059e+37
    %v1562 = vand.u32 %v1505, 2147483648
    %v1563 = vor.u32 1.1754944e-38, %v1562
    %v1564 = vsel %vm1561, %v1563, %v1559
    %v1565 = vmul.f32 1.0, %v1564
    %v1566 = vmul.f32 %v1520, 1.0614054
    %v1567 = vmul.f32 %v1535, 1.0614054
    %v1568 = vmul.f32 %v1550, 1.0614054
    %v1569 = vmul.f32 %v1565, 1.0614054
    %v1570 = vadd.f32 %v1566, -1.4531521
    %v1571 = vadd.f32 %v1567, -1.4531521
    %v1572 = vadd.f32 %v1568, -1.4531521
    %v1573 = vadd.f32 %v1569, -1.4531521
    %v1574 = vmul.f32 %v1570, %v1520
    %v1575 = vmul.f32 %v1571, %v1535
    %v1576 = vmul.f32 %v1572, %v1550
    %v1577 = vmul.f32 %v1573, %v1565
    %v1578 = vadd.f32 %v1574, 1.4214138
    %v1579 = vadd.f32 %v1575, 1.4214138
    %v1580 = vadd.f32 %v1576, 1.4214138
    %v1581 = vadd.f32 %v1577, 1.4214138
    %v1582 = vmul.f32 %v1578, %v1520
    %v1583 = vmul.f32 %v1579, %v1535
    %v1584 = vmul.f32 %v1580, %v1550
    %v1585 = vmul.f32 %v1581, %v1565
    %v1586 = vadd.f32 %v1582, -0.28449672
    %v1587 = vadd.f32 %v1583, -0.28449672
    %v1588 = vadd.f32 %v1584, -0.28449672
    %v1589 = vadd.f32 %v1585, -0.28449672
    %v1590 = vmul.f32 %v1586, %v1520
    %v1591 = vmul.f32 %v1587, %v1535
    %v1592 = vmul.f32 %v1588, %v1550
    %v1593 = vmul.f32 %v1589, %v1565
    %v1594 = vadd.f32 %v1590, 0.2548296
    %v1595 = vadd.f32 %v1591, 0.2548296
    %v1596 = vadd.f32 %v1592, 0.2548296
    %v1597 = vadd.f32 %v1593, 0.2548296
    %v1598 = vmul.f32 %v1594, %v1520
    %v1599 = vmul.f32 %v1595, %v1535
    %v1600 = vmul.f32 %v1596, %v1550
    %v1601 = vmul.f32 %v1597, %v1565
    %v1602 = vsub.f32 0.0, %v1494
    %v1603 = vsub.f32 0.0, %v1495
    %v1604 = vsub.f32 0.0, %v1496
    %v1605 = vsub.f32 0.0, %v1497
    %v1606 = vmul.f32 %v1602, %v1494
    %v1607 = vmul.f32 %v1603, %v1495
    %v1608 = vmul.f32 %v1604, %v1496
    %v1609 = vmul.f32 %v1605, %v1497
    %v1610 = vmul.f32 %v1606, 1.442695
    %v1611 = vpow.pop %v1610
    %v1612 = vmul.f32 %v1607, 1.442695
    %v1613 = vpow.pop %v1612
    %v1614 = vmul.f32 %v1608, 1.442695
    %v1615 = vpow.pop %v1614
    %v1616 = vmul.f32 %v1609, 1.442695
    %v1617 = vpow.pop %v1616
    %v1618 = vmul.f32 %v1598, %v1611
    %v1619 = vmul.f32 %v1599, %v1613
    %v1620 = vmul.f32 %v1600, %v1615
    %v1621 = vmul.f32 %v1601, %v1617
    %v1622 = vsub.f32 1.0, %v1618
    %v1623 = vsub.f32 1.0, %v1619
    %v1624 = vsub.f32 1.0, %v1620
    %v1625 = vsub.f32 1.0, %v1621
    %vm1626 = vcmp.ge.f32.partialorder %v1490, 0.0
    %vm1627 = vcmp.ge.f32.partialorder %v1491, 0.0
    %vm1628 = vcmp.ge.f32.partialorder %v1492, 0.0
    %vm1629 = vcmp.ge.f32.partialorder %v1493, 0.0
    %v1630 = vsub.f32 0.0, %v1622
    %v1631 = vsub.f32 0.0, %v1623
    %v1632 = vsub.f32 0.0, %v1624
    %v1633 = vsub.f32 0.0, %v1625
    %v1634 = vsel %vm1626, %v1622, %v1630
    %v1635 = vsel %vm1627, %v1623, %v1631
    %v1636 = vsel %vm1628, %v1624, %v1632
    %v1637 = vsel %vm1629, %v1625, %v1633
    %v1638 = vadd.f32 %v1634, 1.0
    %v1639 = vadd.f32 %v1635, 1.0
    %v1640 = vadd.f32 %v1636, 1.0
    %v1641 = vadd.f32 %v1637, 1.0
    %v1642 = vmul.f32 %v1486, %v1638
    %v1643 = vmul.f32 %v1487, %v1639
    %v1644 = vmul.f32 %v1488, %v1640
    %v1645 = vmul.f32 %v1489, %v1641
    %v1646 = vld [vmem:[%s12] sm:$0xff]
    %v1647 = vld [vmem:[%s12 + $0x8] sm:$0xff]
    %v1648 = vld [vmem:[%s12 + $0x10] sm:$0xff]
    %v1649 = vld [vmem:[%s12 + $0x18] sm:$0xff]
    %v1650 = vld [vmem:[%s12 + $0x20] sm:$0xff]
    %v1651 = vld [vmem:[%s12 + $0x28] sm:$0xff]
    %v1652 = vld [vmem:[%s12 + $0x30] sm:$0xff]
    %v1653 = vld [vmem:[%s12 + $0x38] sm:$0xff]
    %v1654 = vld [vmem:[%s12 + $0x40] sm:$0xff]
    %v1655 = vld [vmem:[%s12 + $0x48] sm:$0xff]
    %v1656 = vld [vmem:[%s12 + $0x50] sm:$0xff]
    %v1657 = vld [vmem:[%s12 + $0x58] sm:$0xff]
    %v1658 = vld [vmem:[%s12 + $0x60] sm:$0xff]
    %v1659 = vld [vmem:[%s12 + $0x68] sm:$0xff]
    %v1660 = vld [vmem:[%s12 + $0x70] sm:$0xff]
    %v1661 = vld [vmem:[%s12 + $0x78] sm:$0xff]
    %v1662 = vld [vmem:[%s12 + $0x80] sm:$0xff]
    %v1663 = vld [vmem:[%s12 + $0x88] sm:$0xff]
    %v1664 = vld [vmem:[%s12 + $0x90] sm:$0xff]
    %v1665 = vld [vmem:[%s12 + $0x98] sm:$0xff]
    %v1666 = vld [vmem:[%s12 + $0xa0] sm:$0xff]
    %v1667 = vld [vmem:[%s12 + $0xa8] sm:$0xff]
    %v1668 = vld [vmem:[%s12 + $0xb0] sm:$0xff]
    %v1669 = vld [vmem:[%s12 + $0xb8] sm:$0xff]
    %v1670 = vld [vmem:[%s12 + $0xc0] sm:$0xff]
    %v1671 = vld [vmem:[%s12 + $0xc8] sm:$0xff]
    %v1672 = vld [vmem:[%s12 + $0xd0] sm:$0xff]
    %v1673 = vld [vmem:[%s12 + $0xd8] sm:$0xff]
    %v1674 = vld [vmem:[%s12 + $0xe0] sm:$0xff]
    %v1675 = vld [vmem:[%s12 + $0xe8] sm:$0xff]
    %v1676 = vld [vmem:[%s12 + $0xf0] sm:$0xff]
    %v1677 = vld [vmem:[%s12 + $0xf8] sm:$0xff]
    %v1678 = vld [vmem:[%s12 + $0x100] sm:$0xff]
    %v1679 = vld [vmem:[%s12 + $0x108] sm:$0xff]
    %v1680 = vld [vmem:[%s12 + $0x110] sm:$0xff]
    %v1681 = vld [vmem:[%s12 + $0x118] sm:$0xff]
    %v1682 = vld [vmem:[%s12 + $0x120] sm:$0xff]
    %v1683 = vld [vmem:[%s12 + $0x128] sm:$0xff]
    %v1684 = vld [vmem:[%s12 + $0x130] sm:$0xff]
    %v1685 = vld [vmem:[%s12 + $0x138] sm:$0xff]
    %v1686 = vld [vmem:[%s12 + $0x140] sm:$0xff]
    %v1687 = vld [vmem:[%s12 + $0x148] sm:$0xff]
    %v1688 = vld [vmem:[%s12 + $0x150] sm:$0xff]
    %v1689 = vld [vmem:[%s12 + $0x158] sm:$0xff]
    %v1690 = vld [vmem:[%s12 + $0x160] sm:$0xff]
    %v1691 = vld [vmem:[%s12 + $0x168] sm:$0xff]
    %v1692 = vld [vmem:[%s12 + $0x170] sm:$0xff]
    %v1693 = vld [vmem:[%s12 + $0x178] sm:$0xff]
    %v1694 = vld [vmem:[%s12 + $0x180] sm:$0xff]
    %v1695 = vld [vmem:[%s12 + $0x188] sm:$0xff]
    %v1696 = vld [vmem:[%s12 + $0x190] sm:$0xff]
    %v1697 = vld [vmem:[%s12 + $0x198] sm:$0xff]
    %v1698 = vld [vmem:[%s12 + $0x1a0] sm:$0xff]
    %v1699 = vld [vmem:[%s12 + $0x1a8] sm:$0xff]
    %v1700 = vld [vmem:[%s12 + $0x1b0] sm:$0xff]
    %v1701 = vld [vmem:[%s12 + $0x1b8] sm:$0xff]
    %v1702 = vld [vmem:[%s12 + $0x1c0] sm:$0xff]
    %v1703 = vld [vmem:[%s12 + $0x1c8] sm:$0xff]
    %v1704 = vld [vmem:[%s12 + $0x1d0] sm:$0xff]
    %v1705 = vld [vmem:[%s12 + $0x1d8] sm:$0xff]
    %v1706 = vld [vmem:[%s12 + $0x1e0] sm:$0xff]
    %v1707 = vld [vmem:[%s12 + $0x1e8] sm:$0xff]
    %v1708 = vld [vmem:[%s12 + $0x1f0] sm:$0xff]
    %v1709 = vld [vmem:[%s12 + $0x1f8] sm:$0xff]
    %v1710 = vld [vmem:[%s13] sm:$0x1]
    %v1712 = vperm.slane %v1710, 0
    %1714 = vmatpush.msra.mxu0 %v1661
    %1715 = vmatpush.msra.mxu0 %v1660
    %1716 = vmatpush.msra.mxu0 %v1659
    %1717 = vmatpush.msra.mxu0 %v1658
    %1718 = vmatpush.msra.mxu0 %v1657
    %1719 = vmatpush.msra.mxu0 %v1656
    %1720 = vmatpush.msra.mxu0 %v1655
    %1721 = vmatpush.msra.mxu0 %v1654
    %1722 = vmatpush.msra.mxu0 %v1653
    %1723 = vmatpush.msra.mxu0 %v1652
    %1724 = vmatpush.msra.mxu0 %v1651
    %1725 = vmatpush.msra.mxu0 %v1650
    %1726 = vmatpush.msra.mxu0 %v1649
    %1727 = vmatpush.msra.mxu0 %v1648
    %1728 = vmatpush.msra.mxu0 %v1647
    %1729 = vmatpush.msra.mxu0 %v1646
    %1730 = vmatmul.f32.gmra.mxu0 %v1642
    %v1731 = vpop.f32.mrf.mxu0
    %v1732 = vadd.f32 %v1712, %v1731
    %1733 = vdwg.mxu0
    %1734 = vmatpush.msra.mxu0 %v1677
    %1735 = vmatpush.msra.mxu0 %v1676
    %1736 = vmatpush.msra.mxu0 %v1675
    %1737 = vmatpush.msra.mxu0 %v1674
    %1738 = vmatpush.msra.mxu0 %v1673
    %1739 = vmatpush.msra.mxu0 %v1672
    %1740 = vmatpush.msra.mxu0 %v1671
    %1741 = vmatpush.msra.mxu0 %v1670
    %1742 = vmatpush.msra.mxu0 %v1669
    %1743 = vmatpush.msra.mxu0 %v1668
    %1744 = vmatpush.msra.mxu0 %v1667
    %1745 = vmatpush.msra.mxu0 %v1666
    %1746 = vmatpush.msra.mxu0 %v1665
    %1747 = vmatpush.msra.mxu0 %v1664
    %1748 = vmatpush.msra.mxu0 %v1663
    %1749 = vmatpush.msra.mxu0 %v1662
    %1750 = vmatmul.f32.gmra.mxu0 %v1643
    %v1751 = vpop.f32.mrf.mxu0
    %v1752 = vadd.f32 %v1732, %v1751
    %1753 = vdwg.mxu0
    %1754 = vmatpush.msra.mxu0 %v1693
    %1755 = vmatpush.msra.mxu0 %v1692
    %1756 = vmatpush.msra.mxu0 %v1691
    %1757 = vmatpush.msra.mxu0 %v1690
    %1758 = vmatpush.msra.mxu0 %v1689
    %1759 = vmatpush.msra.mxu0 %v1688
    %1760 = vmatpush.msra.mxu0 %v1687
    %1761 = vmatpush.msra.mxu0 %v1686
    %1762 = vmatpush.msra.mxu0 %v1685
    %1763 = vmatpush.msra.mxu0 %v1684
    %1764 = vmatpush.msra.mxu0 %v1683
    %1765 = vmatpush.msra.mxu0 %v1682
    %1766 = vmatpush.msra.mxu0 %v1681
    %1767 = vmatpush.msra.mxu0 %v1680
    %1768 = vmatpush.msra.mxu0 %v1679
    %1769 = vmatpush.msra.mxu0 %v1678
    %1770 = vmatmul.f32.gmra.mxu0 %v1644
    %v1771 = vpop.f32.mrf.mxu0
    %v1772 = vadd.f32 %v1752, %v1771
    %1773 = vdwg.mxu0
    %1774 = vmatpush.msra.mxu0 %v1709
    %1775 = vmatpush.msra.mxu0 %v1708
    %1776 = vmatpush.msra.mxu0 %v1707
    %1777 = vmatpush.msra.mxu0 %v1706
    %1778 = vmatpush.msra.mxu0 %v1705
    %1779 = vmatpush.msra.mxu0 %v1704
    %1780 = vmatpush.msra.mxu0 %v1703
    %1781 = vmatpush.msra.mxu0 %v1702
    %1782 = vmatpush.msra.mxu0 %v1701
    %1783 = vmatpush.msra.mxu0 %v1700
    %1784 = vmatpush.msra.mxu0 %v1699
    %1785 = vmatpush.msra.mxu0 %v1698
    %1786 = vmatpush.msra.mxu0 %v1697
    %1787 = vmatpush.msra.mxu0 %v1696
    %1788 = vmatpush.msra.mxu0 %v1695
    %1789 = vmatpush.msra.mxu0 %v1694
    %1790 = vmatmul.f32.gmra.mxu0 %v1645
    %v1791 = vpop.f32.mrf.mxu0
    %v1792 = vadd.f32 %v1772, %v1791
    %1793 = vdwg.mxu0
    %vm1794 = vcmask 60416
    %1795 = vst.msk [vmem:[#allocation4] sm:$0xf] %vm1794, %v1792
    // Predicated region
    $region58: #{patch_rnn_forward.1} parent=1 // pred_check
      _
    $region59: #{patch_rnn_forward.1} parent=1 // pred_check_branch
      %1797 = sbr.rel (0) target = $region61
    $region60: #{patch_rnn_forward.1} parent=1 // pred_region
      %1799 = vsyncadd [#allocation5], 0
      %s1801 = sshll.u32 [#allocation4], 4
      %s1802 = int_to_ptr.vmem [resolvable:$true] %s1801
      %s1803 = sshll.u32 %s14, 4
      %s1804 = int_to_ptr.hbm [resolvable:$true] %s1803
      %1806 = dma.vmem_to_hbm [thread:$0]  %s1802, 64, %s1804, [#allocation5]
    $region61: #{patch_rnn_forward.1} parent=1 // pred_fallthru
      _
    // Predicated region
    $region62: #{patch_rnn_forward.1} parent=1 // pred_check
      _
    $region63: #{patch_rnn_forward.1} parent=1 // pred_check_branch
      %1808 = sbr.rel (0) target = $region65
    $region64: #{patch_rnn_forward.1} parent=1 // pred_region
      %1810 = dma.done [#allocation5], 64
    $region65: #{patch_rnn_forward.1} parent=1 // pred_fallthru
      _
    %1811 = vsyncpa [#allocation5], 1

</llo_original>
